<compile_context>
chip_gen: v5e
topology: v5e:2x2
jax: 0.10.0
libtpu: 0.0.40
codegen_flags: <defaults>
</compile_context>

<pallas_src>
import functools

import jax
import jax.numpy as jnp
from jax.experimental import pallas as pl
from jax.experimental.pallas import tpu as pltpu


def _round_up(x, m):
    return (x + m - 1) // m * m


# ----------------------------------------------------------------------------- kernel
def _bahdanau_decode_kernel(
    onehot_ref, hid_init_ref, enc_ref,
    emb_proj_ref, attn_we_ref, attn_b_ref, v_ref,
    w_h1_ref, w_ih0c_ref, bih0_ref, whh0_ref, bhh0_ref,
    wih1_ref, bih1_ref, bhh1_ref, outw_ref, outb_ref,
    logp_ref, newh_ref,
    *, valid_seq,
):
    f32, bf16 = jnp.float32, jnp.bfloat16
    Bp, Sp, Hp = enc_ref.shape
    t = pl.program_id(0)

    # Hidden state is carried in the (constant-index-map) output block -> VMEM-resident
    # across the whole grid; initialize once at t == 0.
    @pl.when(t == 0)
    def _():
        newh_ref[...] = hid_init_ref[...]

    h0 = newh_ref[0]                                     # (Bp, Hp) f32
    h1 = newh_ref[1]                                     # (Bp, Hp) f32  (== hidden[-1])
    enc = enc_ref[...]                                   # (Bp, Sp, Hp) bf16

    # ---- fused h1 projection: [ attention part_h | GRU-1 gh1 ] in one MXU pass ----
    h1_proj = jnp.dot(h1.astype(bf16), w_h1_ref[...], preferred_element_type=f32)
    part_h = h1_proj[:, :Hp]                             # (Bp, Hp)
    gh1 = h1_proj[:, Hp:] + bhh1_ref[...]                # (Bp, 3Hp) lane-aligned gates

    # ---- attention: energy -> masked scores -> softmax -> context ----
    # Sp % 16 == 0, so the bf16 (Bp,Sp,Hp) <-> (Bp*Sp,Hp) reshape is layout-free.
    part_e = jnp.dot(enc.reshape(Bp * Sp, Hp), attn_we_ref[...],
                     preferred_element_type=f32).reshape(Bp, Sp, Hp)
    energy = jnp.tanh(part_e + part_h[:, None, :] + attn_b_ref[...])      # (Bp, Sp, Hp)
    scores = jnp.sum(energy * v_ref[...], axis=-1)                        # (Bp, Sp)
    s_iota = jax.lax.broadcasted_iota(jnp.int32, (Bp, Sp), 1)
    scores = jnp.where(s_iota < valid_seq, scores, -1e30)                 # mask seq padding
    m = jnp.max(scores, axis=-1, keepdims=True)
    ex = jnp.exp(scores - m)
    alpha = ex * pl.reciprocal(jnp.sum(ex, axis=-1, keepdims=True), approx=True)

    # context on VPU/XLU: broadcast-mul over lanes + sublane reduce over Sp
    # (avoids Bp tiny drain-dominated MXU matmuls).
    context = jnp.sum(enc.astype(f32) * alpha[:, :, None], axis=1)        # (Bp, Hp)

    # ---- GRU layer 0: embedding already folded into emb_proj (Vp, 3Hp) ----
    gi0 = (jnp.dot(onehot_ref[0], emb_proj_ref[...], preferred_element_type=f32)
           + jnp.dot(context.astype(bf16), w_ih0c_ref[...], preferred_element_type=f32)
           + bih0_ref[...])
    gh0 = jnp.dot(h0.astype(bf16), whh0_ref[...], preferred_element_type=f32) + bhh0_ref[...]
    r0 = jax.nn.sigmoid(gi0[:, :Hp] + gh0[:, :Hp])
    z0 = jax.nn.sigmoid(gi0[:, Hp:2 * Hp] + gh0[:, Hp:2 * Hp])
    n0 = jnp.tanh(gi0[:, 2 * Hp:] + r0 * gh0[:, 2 * Hp:])
    h0_new = (1.0 - z0) * n0 + z0 * h0

    # ---- GRU layer 1 (inter-layer dropout is identity at inference) ----
    gi1 = jnp.dot(h0_new.astype(bf16), wih1_ref[...], preferred_element_type=f32) + bih1_ref[...]
    r1 = jax.nn.sigmoid(gi1[:, :Hp] + gh1[:, :Hp])
    z1 = jax.nn.sigmoid(gi1[:, Hp:2 * Hp] + gh1[:, Hp:2 * Hp])
    n1 = jnp.tanh(gi1[:, 2 * Hp:] + r1 * gh1[:, 2 * Hp:])
    h1_new = (1.0 - z1) * n1 + z1 * h1

    newh_ref[0] = h0_new
    newh_ref[1] = h1_new

    # ---- output projection + log-softmax (Op lane-dense; padded logit lanes at -1e30) ----
    logits = (jnp.dot(h1_new.astype(bf16), outw_ref[...], preferred_element_type=f32)
              + outb_ref[...])
    lm = jnp.max(logits, axis=-1, keepdims=True)
    lse = lm + jnp.log(jnp.sum(jnp.exp(logits - lm), axis=-1, keepdims=True))
    logp_ref[0] = logits - lse


# ----------------------------------------------------------------------------- one-time packing
def prepare_kernel_params(params):
    """One-time conversion of PyTorch-layout params into the padded / pre-transposed /
    lane-aligned bf16 kernel layout.  Call once, reuse across all decode sequences."""
    f32, bf16 = jnp.float32, jnp.bfloat16
    H = params["attn_b"].shape[0]
    O = params["out_w"].shape[0]
    V = params["embed"].shape[0]
    Hp = _round_up(H, 128)
    Op = _round_up(O, 128)
    Vp = _round_up(V, 128)

    def pad2(a, rows, cols):
        return jnp.zeros((rows, cols), f32).at[: a.shape[0], : a.shape[1]].set(a)

    def gate_weight_t(w_pt, in_pad):
        # PyTorch (3H, K) gate-stacked weight -> (in_pad, 3*Hp) transposed, each gate
        # (r | z | n) in its own lane-aligned Hp-wide slot.
        K = w_pt.shape[1]
        out = jnp.zeros((in_pad, 3 * Hp), f32)
        for g in range(3):
            out = out.at[:K, g * Hp:g * Hp + H].set(w_pt[g * H:(g + 1) * H, :].T)
        return out

    def gate_bias(b):
        out = jnp.zeros((1, 3 * Hp), f32)
        for g in range(3):
            out = out.at[0, g * Hp:g * Hp + H].set(b[g * H:(g + 1) * H])
        return out

    attn_w, wih0 = params["attn_w"], params["gru_wih0"]

    # Fused h1 weight: cols [0:Hp] = attention hidden-side, [Hp:4Hp] = GRU-1 W_hh gates.
    w_h1 = jnp.zeros((Hp, 4 * Hp), f32)
    w_h1 = w_h1.at[:H, :H].set(attn_w[:, :H].T)
    w_h1 = w_h1.at[:, Hp:].set(gate_weight_t(params["gru_whh1"], Hp))

    # Embedding folded into the GRU-0 embed-side input weight: emb_proj[v] = Wih0_emb^T row(v).
    w_ih0_emb = gate_weight_t(wih0[:, :H], Hp)                     # (Hp, 3Hp)
    emb_proj = pad2(params["embed"], Vp, Hp) @ w_ih0_emb           # (Vp, 3Hp) f32

    return dict(
        emb_proj=emb_proj.astype(bf16),
        attn_we=pad2(attn_w[:, H:].T, Hp, Hp).astype(bf16),
        attn_b=jnp.zeros((1, 1, Hp), f32).at[0, 0, :H].set(params["attn_b"]),
        v=jnp.zeros((1, 1, Hp), f32).at[0, 0, :H].set(params["v"]),
        w_h1=w_h1.astype(bf16),
        w_ih0c=gate_weight_t(wih0[:, H:], Hp).astype(bf16),        # context part of Wih0
        bih0=gate_bias(params["gru_bih0"]),
        whh0=gate_weight_t(params["gru_whh0"], Hp).astype(bf16),
        bhh0=gate_bias(params["gru_bhh0"]),
        wih1=gate_weight_t(params["gru_wih1"], Hp).astype(bf16),
        bih1=gate_bias(params["gru_bih1"]),
        bhh1=gate_bias(params["gru_bhh1"]),
        out_w=pad2(params["out_w"].T, Hp, Op).astype(bf16),
        out_b=jnp.full((1, Op), -1e30, f32).at[0, :O].set(params["out_b"]),
    )


def prepare_decode_inputs(token_ids, hidden, encoder_outputs, kparams):
    """One-time, loop-invariant packing of per-sequence inputs into the padded kernel layout
    (teacher-forced one-hot ids, padded hidden, transposed/padded bf16 encoder outputs)."""
    T, B = token_ids.shape
    L, _, H = hidden.shape
    S = encoder_outputs.shape[0]
    Hp = kparams["attn_we"].shape[0]
    Vp = kparams["emb_proj"].shape[0]
    Bp = _round_up(B, 8)
    Sp = _round_up(S, 16)   # bf16 sublane tile = 16 -> in-kernel reshapes stay layout-free

    onehot = (token_ids[:, :, None] == jnp.arange(Vp, dtype=jnp.int32)[None, None, :])
    onehot_seq = (jnp.zeros((T, Bp, Vp), jnp.bfloat16)
                  .at[:, :B, :].set(onehot.astype(jnp.bfloat16)))   # padded rows: all-zero

    hidden_pad = jnp.zeros((L, Bp, Hp), jnp.float32).at[:, :B, :H].set(hidden)
    enc_bm = jnp.transpose(encoder_outputs, (1, 0, 2)).astype(jnp.bfloat16)   # (B, S, H)
    enc_pad = jnp.zeros((Bp, Sp, Hp), jnp.bfloat16).at[:B, :S, :H].set(enc_bm)
    return onehot_seq, hidden_pad, enc_pad


# ----------------------------------------------------------------------------- pallas_call wrapper
def bahdanau_decode(onehot_seq, hidden_init, enc_pad, kparams, *, valid_seq):
    """Run T teacher-forced decode steps in ONE pallas_call.

    onehot_seq (T,Bp,Vp) bf16; hidden_init (L,Bp,Hp) f32; enc_pad (Bp,Sp,Hp) bf16.
    Returns padded (T,Bp,Op) log-probs and the final (L,Bp,Hp) hidden state."""
    T, Bp, _ = onehot_seq.shape
    L, _, Hp = hidden_init.shape
    assert L == 2, "kernel is specialized to the module default numLayers=2"
    Op = kparams["out_b"].shape[1]

    weight_args = (
        kparams["emb_proj"], kparams["attn_we"], kparams["attn_b"], kparams["v"],
        kparams["w_h1"], kparams["w_ih0c"], kparams["bih0"],
        kparams["whh0"], kparams["bhh0"],
        kparams["wih1"], kparams["bih1"], kparams["bhh1"],
        kparams["out_w"], kparams["out_b"],
    )

    def const_spec(shape):
        # Constant block index across the time grid -> DMA'd once, resident thereafter.
        # (pl.Buffered(1) could drop the unused second buffer; irrelevant at ~600 KB.)
        nd = len(shape)
        return pl.BlockSpec(shape, lambda t, _nd=nd: (0,) * _nd)

    in_specs = (
        [pl.BlockSpec((1, Bp, onehot_seq.shape[2]), lambda t: (t, 0, 0)),
         const_spec(hidden_init.shape),
         const_spec(enc_pad.shape)]
        + [const_spec(w.shape) for w in weight_args]
    )

    kernel = functools.partial(_bahdanau_decode_kernel, valid_seq=valid_seq)

    logp_pad, newh_pad = pl.pallas_call(
        kernel,
        out_shape=(
            jax.ShapeDtypeStruct((T, Bp, Op), jnp.float32),
            jax.ShapeDtypeStruct((L, Bp, Hp), jnp.float32),
        ),
        grid=(T,),   # sequential time axis (hidden carry) -> "arbitrary"
        in_specs=in_specs,
        out_specs=(
            pl.BlockSpec((1, Bp, Op), lambda t: (t, 0, 0)),       # lane-dense per-step slab
            const_spec((L, Bp, Hp)),                              # VMEM-resident hidden carry
        ),
        compiler_params=pltpu.CompilerParams(dimension_semantics=("arbitrary",)),
    )(onehot_seq, hidden_init, enc_pad, *weight_args)
    return logp_pad, newh_pad


# ----------------------------------------------------------------------------- params & reference
def init_params(key, output_size, hidden_size):
    H, O = hidden_size, output_size
    ks = jax.random.split(key, 14)

    def nrm(k, shape, scale):
        return (scale * jax.random.normal(k, shape)).astype(jnp.float32)

    embed = nrm(ks[0], (O, H), 0.1).at[0].set(0.0)           # padding_idx=0
    return dict(
        embed=embed,
        attn_w=nrm(ks[1], (H, 2 * H), 0.1),
        attn_b=nrm(ks[2], (H,), 0.1),
        v=nrm(ks[3], (H,), 1.0 / float(H) ** 0.5),
        gru_wih0=nrm(ks[4], (3 * H, 2 * H), 0.1),
        gru_whh0=nrm(ks[5], (3 * H, H), 0.1),
        gru_bih0=nrm(ks[6], (3 * H,), 0.1),
        gru_bhh0=nrm(ks[7], (3 * H,), 0.1),
        gru_wih1=nrm(ks[8], (3 * H, H), 0.1),
        gru_whh1=nrm(ks[9], (3 * H, H), 0.1),
        gru_bih1=nrm(ks[10], (3 * H,), 0.1),
        gru_bhh1=nrm(ks[11], (3 * H,), 0.1),
        out_w=nrm(ks[12], (O, H), 0.1),
        out_b=nrm(ks[13], (O,), 0.1),
    )


def reference_forward(input_ids, hidden, encoder_outputs, params):
    """Pure-JAX f32 mirror of bahdanauDecoder.forward (single step, inference mode)."""
    H = hidden.shape[-1]
    emb = params["embed"][input_ids]                         # (B, H)
    enc = jnp.transpose(encoder_outputs, (1, 0, 2))          # (B, S, H)
    B, S, _ = enc.shape
    h_last = hidden[-1]

    cat = jnp.concatenate([jnp.broadcast_to(h_last[:, None, :], (B, S, H)), enc], -1)
    energy = jnp.tanh(cat @ params["attn_w"].T + params["attn_b"])
    scores = jnp.einsum("bsh,h->bs", energy, params["v"])
    aw = jax.nn.softmax(scores, axis=-1)
    context = jnp.einsum("bs,bsh->bh", aw, enc)

    def gru_cell(x, h, wih, whh, bih, bhh):
        gi = x @ wih.T + bih
        gh = h @ whh.T + bhh
        r = jax.nn.sigmoid(gi[:, :H] + gh[:, :H])
        z = jax.nn.sigmoid(gi[:, H:2 * H] + gh[:, H:2 * H])
        n = jnp.tanh(gi[:, 2 * H:] + r * gh[:, 2 * H:])
        return (1.0 - z) * n + z * h

    x = jnp.concatenate([emb, context], axis=-1)
    h0n = gru_cell(x, hidden[0], params["gru_wih0"], params["gru_whh0"],
                   params["gru_bih0"], params["gru_bhh0"])
    h1n = gru_cell(h0n, hidden[1], params["gru_wih1"], params["gru_whh1"],
                   params["gru_bih1"], params["gru_bhh1"])
    logits = h1n @ params["out_w"].T + params["out_b"]
    return jax.nn.log_softmax(logits, axis=-1), jnp.stack([h0n, h1n])


# ----------------------------------------------------------------------------- main
if __name__ == "__main__":
    B, S, H, O, L, T = 4, 8, 32, 64, 2, 6   # batch, seq, hiddenSize, outputSize, numLayers, steps

    key = jax.random.PRNGKey(0)
    kp, k1, k2, k3 = jax.random.split(key, 4)
    params = init_params(kp, O, H)
    kparams = prepare_kernel_params(params)                  # one-time weight repacking

    token_ids = jax.random.randint(k1, (T, B), 0, O, dtype=jnp.int32)   # teacher-forced ids
    hidden0 = jax.random.normal(k2, (L, B, H), dtype=jnp.float32)
    encoder_outputs = jax.random.normal(k3, (S, B, H), dtype=jnp.float32)

    # one-time input packing (loop-invariant glue hoisted out of the decode loop)
    onehot_seq, hidden_pad, enc_pad = prepare_decode_inputs(
        token_ids, hidden0, encoder_outputs, kparams)

    decode = jax.jit(bahdanau_decode, static_argnames=("valid_seq",))
    logp_pad, newh_pad = decode(onehot_seq, hidden_pad, enc_pad, kparams, valid_seq=S)
    jax.block_until_ready((logp_pad, newh_pad))

    logp = logp_pad[:, :B, :O]
    new_hidden = newh_pad[:, :B, :H]
    assert logp.shape == (T, B, O) and new_hidden.shape == (L, B, H)

    # Reference: T calls of the single-step module forward (teacher forcing).
    ref_logps, ref_h = [], hidden0
    for t in range(T):
        lp, ref_h = reference_forward(token_ids[t], ref_h, encoder_outputs, params)
        ref_logps.append(lp)
    ref_logp = jnp.stack(ref_logps)

    # bf16 weights / f32 accumulation + approx softmax reciprocal, accumulated over T
    # recurrent steps, vs. the pure-f32 reference -> moderate tolerance.
    assert jnp.allclose(logp, ref_logp, atol=1e-1, rtol=5e-2), \
        float(jnp.max(jnp.abs(logp - ref_logp)))
    assert jnp.allclose(new_hidden, ref_h, atol=1e-1, rtol=5e-2), \
        float(jnp.max(jnp.abs(new_hidden - ref_h)))

    print("KERNEL_OK")
</pallas_src>

<mosaic_0001>
module attributes {stable_mosaic.version = 11 : i64} {
  func.func @_bahdanau_decode_kernel(%arg0: i32, %arg1: memref<1x8x128xbf16, #tpu.memory_space<vmem>>, %arg2: memref<2x8x128xf32, #tpu.memory_space<vmem>>, %arg3: memref<8x16x128xbf16, #tpu.memory_space<vmem>>, %arg4: memref<128x384xbf16, #tpu.memory_space<vmem>>, %arg5: memref<128x128xbf16, #tpu.memory_space<vmem>>, %arg6: memref<1x1x128xf32, #tpu.memory_space<vmem>>, %arg7: memref<1x1x128xf32, #tpu.memory_space<vmem>>, %arg8: memref<128x512xbf16, #tpu.memory_space<vmem>>, %arg9: memref<128x384xbf16, #tpu.memory_space<vmem>>, %arg10: memref<1x384xf32, #tpu.memory_space<vmem>>, %arg11: memref<128x384xbf16, #tpu.memory_space<vmem>>, %arg12: memref<1x384xf32, #tpu.memory_space<vmem>>, %arg13: memref<128x384xbf16, #tpu.memory_space<vmem>>, %arg14: memref<1x384xf32, #tpu.memory_space<vmem>>, %arg15: memref<1x384xf32, #tpu.memory_space<vmem>>, %arg16: memref<128x128xbf16, #tpu.memory_space<vmem>>, %arg17: memref<1x128xf32, #tpu.memory_space<vmem>>, %arg18: memref<1x8x128xf32, #tpu.memory_space<vmem>>, %arg19: memref<2x8x128xf32, #tpu.memory_space<vmem>>) attributes {dimension_semantics = [#tpu.dimension_semantics<arbitrary>], iteration_bounds = array<i64: 6>, scalar_prefetch = 0 : i64, scratch_operands = 0 : i64, tpu.core_type = #tpu.core_type<tc>, window_params = [{transform_indices = @transform_0, window_bounds = array<i64: 1, 8, 128>}, {pipeline_mode = #tpu.pipeline_mode<synchronous>, transform_indices = @transform_1, window_bounds = array<i64: 2, 8, 128>}, {pipeline_mode = #tpu.pipeline_mode<synchronous>, transform_indices = @transform_2, window_bounds = array<i64: 8, 16, 128>}, {pipeline_mode = #tpu.pipeline_mode<synchronous>, transform_indices = @transform_3, window_bounds = array<i64: 128, 384>}, {pipeline_mode = #tpu.pipeline_mode<synchronous>, transform_indices = @transform_4, window_bounds = array<i64: 128, 128>}, {pipeline_mode = #tpu.pipeline_mode<synchronous>, transform_indices = @transform_5, window_bounds = array<i64: 1, 1, 128>}, {pipeline_mode = #tpu.pipeline_mode<synchronous>, transform_indices = @transform_6, window_bounds = array<i64: 1, 1, 128>}, {pipeline_mode = #tpu.pipeline_mode<synchronous>, transform_indices = @transform_7, window_bounds = array<i64: 128, 512>}, {pipeline_mode = #tpu.pipeline_mode<synchronous>, transform_indices = @transform_8, window_bounds = array<i64: 128, 384>}, {pipeline_mode = #tpu.pipeline_mode<synchronous>, transform_indices = @transform_9, window_bounds = array<i64: 1, 384>}, {pipeline_mode = #tpu.pipeline_mode<synchronous>, transform_indices = @transform_10, window_bounds = array<i64: 128, 384>}, {pipeline_mode = #tpu.pipeline_mode<synchronous>, transform_indices = @transform_11, window_bounds = array<i64: 1, 384>}, {pipeline_mode = #tpu.pipeline_mode<synchronous>, transform_indices = @transform_12, window_bounds = array<i64: 128, 384>}, {pipeline_mode = #tpu.pipeline_mode<synchronous>, transform_indices = @transform_13, window_bounds = array<i64: 1, 384>}, {pipeline_mode = #tpu.pipeline_mode<synchronous>, transform_indices = @transform_14, window_bounds = array<i64: 1, 384>}, {pipeline_mode = #tpu.pipeline_mode<synchronous>, transform_indices = @transform_15, window_bounds = array<i64: 128, 128>}, {pipeline_mode = #tpu.pipeline_mode<synchronous>, transform_indices = @transform_16, window_bounds = array<i64: 1, 128>}, {transform_indices = @transform_17, window_bounds = array<i64: 1, 8, 128>}, {pipeline_mode = #tpu.pipeline_mode<synchronous>, transform_indices = @transform_18, window_bounds = array<i64: 2, 8, 128>}]} {
    %c0_i32 = arith.constant 0 : i32
    %0 = arith.cmpi eq, %arg0, %c0_i32 : i32
    %1 = arith.extui %0 : i1 to i32
    %c0_i32_0 = arith.constant 0 : i32
    %2 = arith.cmpi ne, %1, %c0_i32_0 : i32
    scf.if %2 {
      %c0_69 = arith.constant 0 : index
      %c0_70 = arith.constant 0 : index
      %c0_71 = arith.constant 0 : index
      %152 = vector.load %arg2[%c0_69, %c0_70, %c0_71] : memref<2x8x128xf32, #tpu.memory_space<vmem>>, vector<2x8x128xf32>
      %c0_72 = arith.constant 0 : index
      %c0_73 = arith.constant 0 : index
      %c0_74 = arith.constant 0 : index
      %153 = vector.load %arg19[%c0_72, %c0_73, %c0_74] : memref<2x8x128xf32, #tpu.memory_space<vmem>>, vector<2x8x128xf32>
      tpu.vector_store %arg19[%c0_72, %c0_73, %c0_74], %152 {strides = array<i32>} : memref<2x8x128xf32, #tpu.memory_space<vmem>>, vector<2x8x128xf32>,
    } else {
    }
    %c0 = arith.constant 0 : index
    %c0_1 = arith.constant 0 : index
    %c0_2 = arith.constant 0 : index
    %3 = vector.load %arg19[%c0, %c0_1, %c0_2] : memref<2x8x128xf32, #tpu.memory_space<vmem>>, vector<1x8x128xf32>
    %4 = vector.shape_cast %3 : vector<1x8x128xf32> to vector<8x128xf32>
    %c1 = arith.constant 1 : index
    %c0_3 = arith.constant 0 : index
    %c0_4 = arith.constant 0 : index
    %5 = vector.load %arg19[%c1, %c0_3, %c0_4] : memref<2x8x128xf32, #tpu.memory_space<vmem>>, vector<1x8x128xf32>
    %6 = vector.shape_cast %5 : vector<1x8x128xf32> to vector<8x128xf32>
    %c0_5 = arith.constant 0 : index
    %c0_6 = arith.constant 0 : index
    %c0_7 = arith.constant 0 : index
    %7 = vector.load %arg3[%c0_5, %c0_6, %c0_7] : memref<8x16x128xbf16, #tpu.memory_space<vmem>>, vector<8x16x128xbf16>
    %8 = arith.truncf %6 : vector<8x128xf32> to vector<8x128xbf16>
    %c0_8 = arith.constant 0 : index
    %c0_9 = arith.constant 0 : index
    %9 = vector.load %arg8[%c0_8, %c0_9] : memref<128x512xbf16, #tpu.memory_space<vmem>>, vector<128x512xbf16>
    %cst = arith.constant dense<0.000000e+00> : vector<8x512xf32>
    %10 = tpu.matmul %8, %9, %cst {dimension_numbers = #tpu.dot_dimension_numbers<[1], [0], [0], [1], [0, 0, 1, 1], [], []>} : vector<8x128xbf16>, vector<128x512xbf16>, vector<8x512xf32> -> vector<8x512xf32>
    %11 = vector.extract_strided_slice %10 {offsets = [0, 0], sizes = [8, 128], strides = [1, 1]} : vector<8x512xf32> to vector<8x128xf32>
    %12 = vector.extract_strided_slice %10 {offsets = [0, 128], sizes = [8, 384], strides = [1, 1]} : vector<8x512xf32> to vector<8x384xf32>
    %c0_10 = arith.constant 0 : index
    %c0_11 = arith.constant 0 : index
    %13 = vector.load %arg15[%c0_10, %c0_11] : memref<1x384xf32, #tpu.memory_space<vmem>>, vector<1x384xf32>
    %14 = vector.broadcast %13 : vector<1x384xf32> to vector<8x384xf32>
    %15 = arith.addf %12, %14 : vector<8x384xf32>
    %16 = vector.shape_cast %7 : vector<8x16x128xbf16> to vector<128x128xbf16>
    %c0_12 = arith.constant 0 : index
    %c0_13 = arith.constant 0 : index
    %17 = vector.load %arg5[%c0_12, %c0_13] : memref<128x128xbf16, #tpu.memory_space<vmem>>, vector<128x128xbf16>
    %cst_14 = arith.constant dense<0.000000e+00> : vector<128x128xf32>
    %18 = tpu.matmul %16, %17, %cst_14 {dimension_numbers = #tpu.dot_dimension_numbers<[1], [0], [0], [1], [0, 0, 1, 1], [], []>} : vector<128x128xbf16>, vector<128x128xbf16>, vector<128x128xf32> -> vector<128x128xf32>
    %19 = vector.shape_cast %18 : vector<128x128xf32> to vector<8x16x128xf32>
    %20 = vector.shape_cast %11 : vector<8x128xf32> to vector<8x1x128xf32>
    %21 = vector.broadcast %20 : vector<8x1x128xf32> to vector<8x16x128xf32>
    %22 = arith.addf %19, %21 : vector<8x16x128xf32>
    %c0_15 = arith.constant 0 : index
    %c0_16 = arith.constant 0 : index
    %c0_17 = arith.constant 0 : index
    %23 = vector.load %arg6[%c0_15, %c0_16, %c0_17] : memref<1x1x128xf32, #tpu.memory_space<vmem>>, vector<1x1x128xf32>
    %24 = vector.broadcast %23 : vector<1x1x128xf32> to vector<8x16x128xf32>
    %25 = arith.addf %22, %24 : vector<8x16x128xf32>
    %26 = math.tanh %25 : vector<8x16x128xf32>
    %c0_18 = arith.constant 0 : index
    %c0_19 = arith.constant 0 : index
    %c0_20 = arith.constant 0 : index
    %27 = vector.load %arg7[%c0_18, %c0_19, %c0_20] : memref<1x1x128xf32, #tpu.memory_space<vmem>>, vector<1x1x128xf32>
    %28 = vector.broadcast %27 : vector<1x1x128xf32> to vector<8x16x128xf32>
    %29 = arith.mulf %26, %28 : vector<8x16x128xf32>
    %cst_21 = arith.constant dense<0.000000e+00> : vector<8x16xf32>
    %30 = vector.multi_reduction <add>, %29, %cst_21 [2] : vector<8x16x128xf32> to vector<8x16xf32>
    %31 = tpu.iota {dimensions = array<i32: 1>} : vector<8x16xi32>
    %c8_i32 = arith.constant 8 : i32
    %32 = vector.broadcast %c8_i32 : i32 to vector<8x16xi32>
    %33 = arith.cmpi slt, %31, %32 : vector<8x16xi32>
    %cst_22 = arith.constant -1.000000e+30 : f32
    %34 = vector.broadcast %cst_22 : f32 to vector<8x16xf32>
    %35 = arith.select %33, %30, %34 : vector<8x16xi1>, vector<8x16xf32>
    %cst_23 = arith.constant dense<0xFF800000> : vector<8xf32>
    %36 = vector.multi_reduction <maximumf>, %35, %cst_23 [1] : vector<8x16xf32> to vector<8xf32>
    %37 = vector.shape_cast %36 : vector<8xf32> to vector<8x1xf32>
    %38 = vector.broadcast %37 : vector<8x1xf32> to vector<8x16xf32>
    %39 = arith.subf %35, %38 : vector<8x16xf32>
    %40 = math.exp %39 : vector<8x16xf32>
    %cst_24 = arith.constant dense<0.000000e+00> : vector<8xf32>
    %41 = vector.multi_reduction <add>, %40, %cst_24 [1] : vector<8x16xf32> to vector<8xf32>
    %42 = vector.shape_cast %41 : vector<8xf32> to vector<8x1xf32>
    %43 = tpu.reciprocal %42 {approx = true} : vector<8x1xf32> -> vector<8x1xf32>
    %44 = vector.broadcast %43 : vector<8x1xf32> to vector<8x16xf32>
    %45 = arith.mulf %40, %44 : vector<8x16xf32>
    %46 = arith.extf %7 : vector<8x16x128xbf16> to vector<8x16x128xf32>
    %47 = vector.shape_cast %45 : vector<8x16xf32> to vector<8x16x1xf32>
    %48 = vector.broadcast %47 : vector<8x16x1xf32> to vector<8x16x128xf32>
    %49 = arith.mulf %46, %48 : vector<8x16x128xf32>
    %cst_25 = arith.constant dense<0.000000e+00> : vector<8x128xf32>
    %50 = vector.multi_reduction <add>, %49, %cst_25 [1] : vector<8x16x128xf32> to vector<8x128xf32>
    %c0_26 = arith.constant 0 : index
    %c0_27 = arith.constant 0 : index
    %c0_28 = arith.constant 0 : index
    %51 = vector.load %arg1[%c0_26, %c0_27, %c0_28] : memref<1x8x128xbf16, #tpu.memory_space<vmem>>, vector<1x8x128xbf16>
    %52 = vector.shape_cast %51 : vector<1x8x128xbf16> to vector<8x128xbf16>
    %c0_29 = arith.constant 0 : index
    %c0_30 = arith.constant 0 : index
    %53 = vector.load %arg4[%c0_29, %c0_30] : memref<128x384xbf16, #tpu.memory_space<vmem>>, vector<128x384xbf16>
    %cst_31 = arith.constant dense<0.000000e+00> : vector<8x384xf32>
    %54 = tpu.matmul %52, %53, %cst_31 {dimension_numbers = #tpu.dot_dimension_numbers<[1], [0], [0], [1], [0, 0, 1, 1], [], []>} : vector<8x128xbf16>, vector<128x384xbf16>, vector<8x384xf32> -> vector<8x384xf32>
    %55 = arith.truncf %50 : vector<8x128xf32> to vector<8x128xbf16>
    %c0_32 = arith.constant 0 : index
    %c0_33 = arith.constant 0 : index
    %56 = vector.load %arg9[%c0_32, %c0_33] : memref<128x384xbf16, #tpu.memory_space<vmem>>, vector<128x384xbf16>
    %cst_34 = arith.constant dense<0.000000e+00> : vector<8x384xf32>
    %57 = tpu.matmul %55, %56, %cst_34 {dimension_numbers = #tpu.dot_dimension_numbers<[1], [0], [0], [1], [0, 0, 1, 1], [], []>} : vector<8x128xbf16>, vector<128x384xbf16>, vector<8x384xf32> -> vector<8x384xf32>
    %58 = arith.addf %54, %57 : vector<8x384xf32>
    %c0_35 = arith.constant 0 : index
    %c0_36 = arith.constant 0 : index
    %59 = vector.load %arg10[%c0_35, %c0_36] : memref<1x384xf32, #tpu.memory_space<vmem>>, vector<1x384xf32>
    %60 = vector.broadcast %59 : vector<1x384xf32> to vector<8x384xf32>
    %61 = arith.addf %58, %60 : vector<8x384xf32>
    %62 = arith.truncf %4 : vector<8x128xf32> to vector<8x128xbf16>
    %c0_37 = arith.constant 0 : index
    %c0_38 = arith.constant 0 : index
    %63 = vector.load %arg11[%c0_37, %c0_38] : memref<128x384xbf16, #tpu.memory_space<vmem>>, vector<128x384xbf16>
    %cst_39 = arith.constant dense<0.000000e+00> : vector<8x384xf32>
    %64 = tpu.matmul %62, %63, %cst_39 {dimension_numbers = #tpu.dot_dimension_numbers<[1], [0], [0], [1], [0, 0, 1, 1], [], []>} : vector<8x128xbf16>, vector<128x384xbf16>, vector<8x384xf32> -> vector<8x384xf32>
    %c0_40 = arith.constant 0 : index
    %c0_41 = arith.constant 0 : index
    %65 = vector.load %arg12[%c0_40, %c0_41] : memref<1x384xf32, #tpu.memory_space<vmem>>, vector<1x384xf32>
    %66 = vector.broadcast %65 : vector<1x384xf32> to vector<8x384xf32>
    %67 = arith.addf %64, %66 : vector<8x384xf32>
    %68 = vector.extract_strided_slice %61 {offsets = [0, 0], sizes = [8, 128], strides = [1, 1]} : vector<8x384xf32> to vector<8x128xf32>
    %69 = vector.extract_strided_slice %67 {offsets = [0, 0], sizes = [8, 128], strides = [1, 1]} : vector<8x384xf32> to vector<8x128xf32>
    %70 = arith.addf %68, %69 : vector<8x128xf32>
    %71 = arith.negf %70 : vector<8x128xf32>
    %72 = math.exp %71 : vector<8x128xf32>
    %cst_42 = arith.constant 1.000000e+00 : f32
    %73 = vector.broadcast %cst_42 : f32 to vector<8x128xf32>
    %74 = arith.addf %73, %72 : vector<8x128xf32>
    %75 = arith.divf %73, %74 : vector<8x128xf32>
    %76 = vector.extract_strided_slice %61 {offsets = [0, 128], sizes = [8, 128], strides = [1, 1]} : vector<8x384xf32> to vector<8x128xf32>
    %77 = vector.extract_strided_slice %67 {offsets = [0, 128], sizes = [8, 128], strides = [1, 1]} : vector<8x384xf32> to vector<8x128xf32>
    %78 = arith.addf %76, %77 : vector<8x128xf32>
    %79 = arith.negf %78 : vector<8x128xf32>
    %80 = math.exp %79 : vector<8x128xf32>
    %cst_43 = arith.constant 1.000000e+00 : f32
    %81 = vector.broadcast %cst_43 : f32 to vector<8x128xf32>
    %82 = arith.addf %81, %80 : vector<8x128xf32>
    %83 = arith.divf %81, %82 : vector<8x128xf32>
    %84 = vector.extract_strided_slice %61 {offsets = [0, 256], sizes = [8, 128], strides = [1, 1]} : vector<8x384xf32> to vector<8x128xf32>
    %85 = vector.extract_strided_slice %67 {offsets = [0, 256], sizes = [8, 128], strides = [1, 1]} : vector<8x384xf32> to vector<8x128xf32>
    %86 = arith.mulf %75, %85 : vector<8x128xf32>
    %87 = arith.addf %84, %86 : vector<8x128xf32>
    %88 = math.tanh %87 : vector<8x128xf32>
    %cst_44 = arith.constant 1.000000e+00 : f32
    %89 = vector.broadcast %cst_44 : f32 to vector<8x128xf32>
    %90 = arith.subf %89, %83 : vector<8x128xf32>
    %91 = arith.mulf %90, %88 : vector<8x128xf32>
    %92 = arith.mulf %83, %4 : vector<8x128xf32>
    %93 = arith.addf %91, %92 : vector<8x128xf32>
    %94 = arith.truncf %93 : vector<8x128xf32> to vector<8x128xbf16>
    %c0_45 = arith.constant 0 : index
    %c0_46 = arith.constant 0 : index
    %95 = vector.load %arg13[%c0_45, %c0_46] : memref<128x384xbf16, #tpu.memory_space<vmem>>, vector<128x384xbf16>
    %cst_47 = arith.constant dense<0.000000e+00> : vector<8x384xf32>
    %96 = tpu.matmul %94, %95, %cst_47 {dimension_numbers = #tpu.dot_dimension_numbers<[1], [0], [0], [1], [0, 0, 1, 1], [], []>} : vector<8x128xbf16>, vector<128x384xbf16>, vector<8x384xf32> -> vector<8x384xf32>
    %c0_48 = arith.constant 0 : index
    %c0_49 = arith.constant 0 : index
    %97 = vector.load %arg14[%c0_48, %c0_49] : memref<1x384xf32, #tpu.memory_space<vmem>>, vector<1x384xf32>
    %98 = vector.broadcast %97 : vector<1x384xf32> to vector<8x384xf32>
    %99 = arith.addf %96, %98 : vector<8x384xf32>
    %100 = vector.extract_strided_slice %99 {offsets = [0, 0], sizes = [8, 128], strides = [1, 1]} : vector<8x384xf32> to vector<8x128xf32>
    %101 = vector.extract_strided_slice %15 {offsets = [0, 0], sizes = [8, 128], strides = [1, 1]} : vector<8x384xf32> to vector<8x128xf32>
    %102 = arith.addf %100, %101 : vector<8x128xf32>
    %103 = arith.negf %102 : vector<8x128xf32>
    %104 = math.exp %103 : vector<8x128xf32>
    %cst_50 = arith.constant 1.000000e+00 : f32
    %105 = vector.broadcast %cst_50 : f32 to vector<8x128xf32>
    %106 = arith.addf %105, %104 : vector<8x128xf32>
    %107 = arith.divf %105, %106 : vector<8x128xf32>
    %108 = vector.extract_strided_slice %99 {offsets = [0, 128], sizes = [8, 128], strides = [1, 1]} : vector<8x384xf32> to vector<8x128xf32>
    %109 = vector.extract_strided_slice %15 {offsets = [0, 128], sizes = [8, 128], strides = [1, 1]} : vector<8x384xf32> to vector<8x128xf32>
    %110 = arith.addf %108, %109 : vector<8x128xf32>
    %111 = arith.negf %110 : vector<8x128xf32>
    %112 = math.exp %111 : vector<8x128xf32>
    %cst_51 = arith.constant 1.000000e+00 : f32
    %113 = vector.broadcast %cst_51 : f32 to vector<8x128xf32>
    %114 = arith.addf %113, %112 : vector<8x128xf32>
    %115 = arith.divf %113, %114 : vector<8x128xf32>
    %116 = vector.extract_strided_slice %99 {offsets = [0, 256], sizes = [8, 128], strides = [1, 1]} : vector<8x384xf32> to vector<8x128xf32>
    %117 = vector.extract_strided_slice %15 {offsets = [0, 256], sizes = [8, 128], strides = [1, 1]} : vector<8x384xf32> to vector<8x128xf32>
    %118 = arith.mulf %107, %117 : vector<8x128xf32>
    %119 = arith.addf %116, %118 : vector<8x128xf32>
    %120 = math.tanh %119 : vector<8x128xf32>
    %cst_52 = arith.constant 1.000000e+00 : f32
    %121 = vector.broadcast %cst_52 : f32 to vector<8x128xf32>
    %122 = arith.subf %121, %115 : vector<8x128xf32>
    %123 = arith.mulf %122, %120 : vector<8x128xf32>
    %124 = arith.mulf %115, %6 : vector<8x128xf32>
    %125 = arith.addf %123, %124 : vector<8x128xf32>
    %c0_53 = arith.constant 0 : index
    %c0_54 = arith.constant 0 : index
    %c0_55 = arith.constant 0 : index
    %126 = vector.load %arg19[%c0_53, %c0_54, %c0_55] : memref<2x8x128xf32, #tpu.memory_space<vmem>>, vector<1x8x128xf32>
    %127 = vector.shape_cast %126 : vector<1x8x128xf32> to vector<8x128xf32>
    %128 = vector.shape_cast %93 : vector<8x128xf32> to vector<1x8x128xf32>
    tpu.vector_store %arg19[%c0_53, %c0_54, %c0_55], %128 {strides = array<i32>} : memref<2x8x128xf32, #tpu.memory_space<vmem>>, vector<1x8x128xf32>,
    %c1_56 = arith.constant 1 : index
    %c0_57 = arith.constant 0 : index
    %c0_58 = arith.constant 0 : index
    %129 = vector.load %arg19[%c1_56, %c0_57, %c0_58] : memref<2x8x128xf32, #tpu.memory_space<vmem>>, vector<1x8x128xf32>
    %130 = vector.shape_cast %129 : vector<1x8x128xf32> to vector<8x128xf32>
    %131 = vector.shape_cast %125 : vector<8x128xf32> to vector<1x8x128xf32>
    tpu.vector_store %arg19[%c1_56, %c0_57, %c0_58], %131 {strides = array<i32>} : memref<2x8x128xf32, #tpu.memory_space<vmem>>, vector<1x8x128xf32>,
    %132 = arith.truncf %125 : vector<8x128xf32> to vector<8x128xbf16>
    %c0_59 = arith.constant 0 : index
    %c0_60 = arith.constant 0 : index
    %133 = vector.load %arg16[%c0_59, %c0_60] : memref<128x128xbf16, #tpu.memory_space<vmem>>, vector<128x128xbf16>
    %cst_61 = arith.constant dense<0.000000e+00> : vector<8x128xf32>
    %134 = tpu.matmul %132, %133, %cst_61 {dimension_numbers = #tpu.dot_dimension_numbers<[1], [0], [0], [1], [0, 0, 1, 1], [], []>} : vector<8x128xbf16>, vector<128x128xbf16>, vector<8x128xf32> -> vector<8x128xf32>
    %c0_62 = arith.constant 0 : index
    %c0_63 = arith.constant 0 : index
    %135 = vector.load %arg17[%c0_62, %c0_63] : memref<1x128xf32, #tpu.memory_space<vmem>>, vector<1x128xf32>
    %136 = vector.broadcast %135 : vector<1x128xf32> to vector<8x128xf32>
    %137 = arith.addf %134, %136 : vector<8x128xf32>
    %cst_64 = arith.constant dense<0xFF800000> : vector<8xf32>
    %138 = vector.multi_reduction <maximumf>, %137, %cst_64 [1] : vector<8x128xf32> to vector<8xf32>
    %139 = vector.shape_cast %138 : vector<8xf32> to vector<8x1xf32>
    %140 = vector.broadcast %139 : vector<8x1xf32> to vector<8x128xf32>
    %141 = arith.subf %137, %140 : vector<8x128xf32>
    %142 = math.exp %141 : vector<8x128xf32>
    %cst_65 = arith.constant dense<0.000000e+00> : vector<8xf32>
    %143 = vector.multi_reduction <add>, %142, %cst_65 [1] : vector<8x128xf32> to vector<8xf32>
    %144 = vector.shape_cast %143 : vector<8xf32> to vector<8x1xf32>
    %145 = math.log %144 : vector<8x1xf32>
    %146 = arith.addf %139, %145 : vector<8x1xf32>
    %147 = vector.broadcast %146 : vector<8x1xf32> to vector<8x128xf32>
    %148 = arith.subf %137, %147 : vector<8x128xf32>
    %c0_66 = arith.constant 0 : index
    %c0_67 = arith.constant 0 : index
    %c0_68 = arith.constant 0 : index
    %149 = vector.load %arg18[%c0_66, %c0_67, %c0_68] : memref<1x8x128xf32, #tpu.memory_space<vmem>>, vector<1x8x128xf32>
    %150 = vector.shape_cast %149 : vector<1x8x128xf32> to vector<8x128xf32>
    %151 = vector.shape_cast %148 : vector<8x128xf32> to vector<1x8x128xf32>
    tpu.vector_store %arg18[%c0_66, %c0_67, %c0_68], %151 {strides = array<i32>} : memref<1x8x128xf32, #tpu.memory_space<vmem>>, vector<1x8x128xf32>,
    return
  }
  func.func @transform_0(%arg0: i32) -> (i32, i32, i32) {
    %c0_i32 = arith.constant 0 : i32
    %c0_i32_0 = arith.constant 0 : i32
    %c0_i32_1 = arith.constant 0 : i32
    return %arg0, %c0_i32, %c0_i32_0 : i32, i32, i32
  }
  func.func @transform_1(%arg0: i32) -> (i32, i32, i32) {
    %c0_i32 = arith.constant 0 : i32
    %c0_i32_0 = arith.constant 0 : i32
    %c0_i32_1 = arith.constant 0 : i32
    %c0_i32_2 = arith.constant 0 : i32
    return %c0_i32, %c0_i32_0, %c0_i32_1 : i32, i32, i32
  }
  func.func @transform_2(%arg0: i32) -> (i32, i32, i32) {
    %c0_i32 = arith.constant 0 : i32
    %c0_i32_0 = arith.constant 0 : i32
    %c0_i32_1 = arith.constant 0 : i32
    %c0_i32_2 = arith.constant 0 : i32
    return %c0_i32, %c0_i32_0, %c0_i32_1 : i32, i32, i32
  }
  func.func @transform_3(%arg0: i32) -> (i32, i32) {
    %c0_i32 = arith.constant 0 : i32
    %c0_i32_0 = arith.constant 0 : i32
    %c0_i32_1 = arith.constant 0 : i32
    return %c0_i32, %c0_i32_0 : i32, i32
  }
  func.func @transform_4(%arg0: i32) -> (i32, i32) {
    %c0_i32 = arith.constant 0 : i32
    %c0_i32_0 = arith.constant 0 : i32
    %c0_i32_1 = arith.constant 0 : i32
    return %c0_i32, %c0_i32_0 : i32, i32
  }
  func.func @transform_5(%arg0: i32) -> (i32, i32, i32) {
    %c0_i32 = arith.constant 0 : i32
    %c0_i32_0 = arith.constant 0 : i32
    %c0_i32_1 = arith.constant 0 : i32
    %c0_i32_2 = arith.constant 0 : i32
    return %c0_i32, %c0_i32_0, %c0_i32_1 : i32, i32, i32
  }
  func.func @transform_6(%arg0: i32) -> (i32, i32, i32) {
    %c0_i32 = arith.constant 0 : i32
    %c0_i32_0 = arith.constant 0 : i32
    %c0_i32_1 = arith.constant 0 : i32
    %c0_i32_2 = arith.constant 0 : i32
    return %c0_i32, %c0_i32_0, %c0_i32_1 : i32, i32, i32
  }
  func.func @transform_7(%arg0: i32) -> (i32, i32) {
    %c0_i32 = arith.constant 0 : i32
    %c0_i32_0 = arith.constant 0 : i32
    %c0_i32_1 = arith.constant 0 : i32
    return %c0_i32, %c0_i32_0 : i32, i32
  }
  func.func @transform_8(%arg0: i32) -> (i32, i32) {
    %c0_i32 = arith.constant 0 : i32
    %c0_i32_0 = arith.constant 0 : i32
    %c0_i32_1 = arith.constant 0 : i32
    return %c0_i32, %c0_i32_0 : i32, i32
  }
  func.func @transform_9(%arg0: i32) -> (i32, i32) {
    %c0_i32 = arith.constant 0 : i32
    %c0_i32_0 = arith.constant 0 : i32
    %c0_i32_1 = arith.constant 0 : i32
    return %c0_i32, %c0_i32_0 : i32, i32
  }
  func.func @transform_10(%arg0: i32) -> (i32, i32) {
    %c0_i32 = arith.constant 0 : i32
    %c0_i32_0 = arith.constant 0 : i32
    %c0_i32_1 = arith.constant 0 : i32
    return %c0_i32, %c0_i32_0 : i32, i32
  }
  func.func @transform_11(%arg0: i32) -> (i32, i32) {
    %c0_i32 = arith.constant 0 : i32
    %c0_i32_0 = arith.constant 0 : i32
    %c0_i32_1 = arith.constant 0 : i32
    return %c0_i32, %c0_i32_0 : i32, i32
  }
  func.func @transform_12(%arg0: i32) -> (i32, i32) {
    %c0_i32 = arith.constant 0 : i32
    %c0_i32_0 = arith.constant 0 : i32
    %c0_i32_1 = arith.constant 0 : i32
    return %c0_i32, %c0_i32_0 : i32, i32
  }
  func.func @transform_13(%arg0: i32) -> (i32, i32) {
    %c0_i32 = arith.constant 0 : i32
    %c0_i32_0 = arith.constant 0 : i32
    %c0_i32_1 = arith.constant 0 : i32
    return %c0_i32, %c0_i32_0 : i32, i32
  }
  func.func @transform_14(%arg0: i32) -> (i32, i32) {
    %c0_i32 = arith.constant 0 : i32
    %c0_i32_0 = arith.constant 0 : i32
    %c0_i32_1 = arith.constant 0 : i32
    return %c0_i32, %c0_i32_0 : i32, i32
  }
  func.func @transform_15(%arg0: i32) -> (i32, i32) {
    %c0_i32 = arith.constant 0 : i32
    %c0_i32_0 = arith.constant 0 : i32
    %c0_i32_1 = arith.constant 0 : i32
    return %c0_i32, %c0_i32_0 : i32, i32
  }
  func.func @transform_16(%arg0: i32) -> (i32, i32) {
    %c0_i32 = arith.constant 0 : i32
    %c0_i32_0 = arith.constant 0 : i32
    %c0_i32_1 = arith.constant 0 : i32
    return %c0_i32, %c0_i32_0 : i32, i32
  }
  func.func @transform_17(%arg0: i32) -> (i32, i32, i32) {
    %c0_i32 = arith.constant 0 : i32
    %c0_i32_0 = arith.constant 0 : i32
    %c0_i32_1 = arith.constant 0 : i32
    return %arg0, %c0_i32, %c0_i32_0 : i32, i32, i32
  }
  func.func @transform_18(%arg0: i32) -> (i32, i32, i32) {
    %c0_i32 = arith.constant 0 : i32
    %c0_i32_0 = arith.constant 0 : i32
    %c0_i32_1 = arith.constant 0 : i32
    %c0_i32_2 = arith.constant 0 : i32
    return %c0_i32, %c0_i32_0, %c0_i32_1 : i32, i32, i32
  }
}

</mosaic_0001>

<llo_original>
// kernel: bahdanau_decode.1
$region0: #{bahdanau_decode.1}
  #allocation0 [shape = 'u32[]', space=smem, size = 0x4, offset = 0x4, fixed_abs, tag = 'smem constant byte address 0x4 - core index']
  #allocation1 [shape = 'u32[72,128]{1,0:T(1,128)}', space=vmem, size = 0x9000, scoped, tag = 'internal scratch']
  %s0 = inlined_call_operand.hbm [shape: bf16[6,8,128], index: 0, kind: input, shape index: {}]
  %s1 = inlined_call_operand.hbm [shape: f32[2,8,128], index: 1, kind: input, shape index: {}]
  %s2 = inlined_call_operand.hbm [shape: bf16[8,16,128], index: 2, kind: input, shape index: {}]
  %s3 = inlined_call_operand.hbm [shape: bf16[128,384], index: 3, kind: input, shape index: {}]
  %s4 = inlined_call_operand.hbm [shape: bf16[128,128], index: 4, kind: input, shape index: {}]
  %s5 = inlined_call_operand.hbm [shape: f32[1,1,128], index: 5, kind: input, shape index: {}]
  %s6 = inlined_call_operand.vmem [shape: f32[1,1,128], index: 6, kind: input, shape index: {}]
  %s7 = inlined_call_operand.hbm [shape: bf16[128,512], index: 7, kind: input, shape index: {}]
  %s8 = inlined_call_operand.hbm [shape: bf16[128,384], index: 8, kind: input, shape index: {}]
  %s9 = inlined_call_operand.vmem [shape: f32[1,384], index: 9, kind: input, shape index: {}]
  %s10 = inlined_call_operand.hbm [shape: bf16[128,384], index: 10, kind: input, shape index: {}]
  %s11 = inlined_call_operand.hbm [shape: f32[1,384], index: 11, kind: input, shape index: {}]
  %s12 = inlined_call_operand.hbm [shape: bf16[128,384], index: 12, kind: input, shape index: {}]
  %s13 = inlined_call_operand.vmem [shape: f32[1,384], index: 13, kind: input, shape index: {}]
  %s14 = inlined_call_operand.hbm [shape: f32[1,384], index: 14, kind: input, shape index: {}]
  %s15 = inlined_call_operand.hbm [shape: bf16[128,128], index: 15, kind: input, shape index: {}]
  %s16 = inlined_call_operand.vmem [shape: f32[1,128], index: 16, kind: input, shape index: {}]
  %s17 = inlined_call_operand.hbm [shape: f32[6,8,128], index: 17, kind: output, shape index: {0}]
  %s18 = inlined_call_operand.hbm [shape: f32[2,8,128], index: 18, kind: output, shape index: {1}]
  %19 = xla_tuple %s17, %s18
  %s20 = sld [smem:[#allocation0]]
  $region165: #{bahdanau_decode.1} parent=0
    _
  %s22 = ssub.s32 1, %s20
  %s23 = scalar_select 0, %s22, %s20
  $region1: #{bahdanau_decode.1} parent=0
    #allocation2 [shape = 'u8[4096]{0}', space=vmem, size = 0x1000, scoped, tag = 'input window, operand 0']
    #allocation3 [shape = 's32[2]{0}', space=sflag, size = 0x8, scoped, tag = 'scoped memory for bahdanau_decode.1']
    #allocation4 [shape = 's32[2]{0}', space=sflag, size = 0x8, scoped, tag = 'scoped memory for bahdanau_decode.1']
    #allocation5 [shape = 'u8[8192]{0}', space=vmem, size = 0x2000, scoped, tag = 'input window, operand 1, single buffered']
    #allocation6 [shape = 's32[1]{0}', space=sflag, size = 0x4, scoped, tag = 'scoped memory for bahdanau_decode.1']
    #allocation7 [shape = 'u8[32768]{0}', space=vmem, size = 0x8000, scoped, tag = 'input window, operand 2, single buffered']
    #allocation8 [shape = 'u8[98304]{0}', space=vmem, size = 0x18000, scoped, tag = 'input window, operand 3, single buffered']
    #allocation9 [shape = 's32[1]{0}', space=sflag, size = 0x4, scoped, tag = 'scoped memory for bahdanau_decode.1']
    #allocation10 [shape = 'u8[32768]{0}', space=vmem, size = 0x8000, scoped, tag = 'input window, operand 4, single buffered']
    #allocation11 [shape = 'u8[512]{0}', space=vmem, size = 0x400, scoped, tag = 'input window, operand 5, single buffered']
    #allocation12 [shape = 's32[1]{0}', space=sflag, size = 0x4, scoped, tag = 'scoped memory for bahdanau_decode.1']
    #allocation13 [shape = 'u8[131072]{0}', space=vmem, size = 0x20000, scoped, tag = 'input window, operand 7, single buffered']
    #allocation14 [shape = 'u8[98304]{0}', space=vmem, size = 0x18000, scoped, tag = 'input window, operand 8, single buffered']
    #allocation15 [shape = 's32[1]{0}', space=sflag, size = 0x4, scoped, tag = 'scoped memory for bahdanau_decode.1']
    #allocation16 [shape = 'u8[98304]{0}', space=vmem, size = 0x18000, scoped, tag = 'input window, operand 10, single buffered']
    #allocation17 [shape = 'u8[1536]{0}', space=vmem, size = 0x800, scoped, tag = 'input window, operand 11, single buffered']
    #allocation18 [shape = 's32[1]{0}', space=sflag, size = 0x4, scoped, tag = 'scoped memory for bahdanau_decode.1']
    #allocation19 [shape = 'u8[98304]{0}', space=vmem, size = 0x18000, scoped, tag = 'input window, operand 12, single buffered']
    #allocation20 [shape = 'u8[1536]{0}', space=vmem, size = 0x800, scoped, tag = 'input window, operand 14, single buffered']
    #allocation21 [shape = 's32[1]{0}', space=sflag, size = 0x4, scoped, tag = 'scoped memory for bahdanau_decode.1']
    #allocation22 [shape = 'u8[32768]{0}', space=vmem, size = 0x8000, scoped, tag = 'input window, operand 15, single buffered']
    #allocation23 [shape = 'u8[8192]{0}', space=vmem, size = 0x2000, scoped, tag = 'output window, operand 0']
    #allocation24 [shape = 'u8[8192]{0}', space=vmem, size = 0x2000, scoped, tag = 'output window, operand 1, single buffered']
    #allocation25 [shape = 's32[1]{0}', space=sflag, size = 0x4, scoped, tag = 'scoped memory for bahdanau_decode.1']
    %24 = vsyncpa [#allocation3], 0
    %s25 = scalar_lea.sflag [#allocation3], 1
    %26 = vsyncpa %s25, 0
    %27 = vsyncpa [#allocation6], 0
    %28 = vsyncpa [#allocation9], 0
    %29 = vsyncpa [#allocation12], 0
    %30 = vsyncpa [#allocation15], 0
    %31 = vsyncpa [#allocation18], 0
    %32 = vsyncpa [#allocation21], 0
    %33 = vsyncpa [#allocation4], 0
    %s34 = scalar_lea.sflag [#allocation4], 1
    %35 = vsyncpa %s34, 0
    %36 = vsyncpa [#allocation25], 0
    loop: start=0, step=1, limit=8
    $region2: #{bahdanau_decode.1} parent=1 // loop_pre_header
      _
    $region3: #{bahdanau_decode.1} parent=1 // loop_header
      %s38 = sphi 0, %s42
      %p39 = scmp.ge.s32.totalorder %s38, 8
      %s48 = sphi 0, %s50
      %s51 = sphi 0, %s48
      %s52 = sphi 0, %s51
      %s68 = sphi 0, %s52
      %s72 = sphi 0, %s72
      %s74 = sphi 0, %s72
      %s75 = sphi 0, %s74
      %s89 = sphi 0, %s75
      %s93 = sphi 0, %s93
      %s95 = sphi 0, %s93
      %s96 = sphi 0, %s95
      %s110 = sphi 0, %s96
      %s114 = sphi 0, %s114
      %s116 = sphi 0, %s114
      %s117 = sphi 0, %s116
      %s131 = sphi 0, %s117
      %s135 = sphi 0, %s135
      %s137 = sphi 0, %s135
      %s138 = sphi 0, %s137
      %s152 = sphi 0, %s138
      %s156 = sphi 0, %s156
      %s158 = sphi 0, %s156
      %s159 = sphi 0, %s158
      %s173 = sphi 0, %s159
      %s177 = sphi 0, %s177
      %s179 = sphi 0, %s177
      %s180 = sphi 0, %s179
      %s194 = sphi 0, %s180
      %s198 = sphi 0, %s198
      %s200 = sphi 0, %s198
      %s201 = sphi 0, %s200
      %s215 = sphi 0, %s201
      %s219 = sphi 0, %s219
      %s221 = sphi 0, %s219
      %s222 = sphi 0, %s221
      %s236 = sphi 0, %s222
      %s240 = sphi 0, %s240
      %s242 = sphi 0, %s240
      %s243 = sphi 0, %s242
      %s257 = sphi 0, %s243
      %s261 = sphi 0, %s261
      %s263 = sphi 0, %s261
      %s264 = sphi 0, %s263
      %s278 = sphi 0, %s264
      %s282 = sphi 0, %s282
      %s284 = sphi 0, %s282
      %s285 = sphi 0, %s284
      %s299 = sphi 0, %s285
      %s303 = sphi 0, %s303
      %s305 = sphi 0, %s303
      %s306 = sphi 0, %s305
      %s320 = sphi 0, %s306
      %s324 = sphi 0, %s324
      %s326 = sphi 0, %s324
      %s327 = sphi 0, %s326
      %s341 = sphi 0, %s327
      %s345 = sphi 0, %s345
      %s347 = sphi 0, %s345
      %s348 = sphi 0, %s347
      %s362 = sphi 0, %s348
      %s366 = sphi 0, %s366
      %s368 = sphi 0, %s366
      %s369 = sphi 0, %s368
      %s383 = sphi 0, %s369
      %s387 = sphi 0, %s387
      %s389 = sphi 0, %s387
      %s390 = sphi 0, %s389
      %s404 = sphi 0, %s390
      %s410 = sphi 0, %s412
      %s413 = sphi 0, %s410
      %s414 = sphi 0, %s413
      %s430 = sphi 0, %s414
      %s434 = sphi 0, %s434
      %s436 = sphi 0, %s434
      %s437 = sphi 0, %s436
      %s451 = sphi 0, %s437
    $region4: #{bahdanau_decode.1} parent=1 // loop_header_branch
      %41 = sbr.rel (%p39) target = $region8
    $region5: #{bahdanau_decode.1} parent=1 // loop_body
      %s43 = ssub.s32 %s38, 1
      %s44 = ssub.s32 %s38, 2
      %s45 = sadd.s32 %s38, 1
      %s46 = ssub.s32 %s38, %s45
      %p47 = scmp.eq.s32.totalorder %s46, 0
      %s49 = sadd.s32 %s48, 1
      %s50 = scalar_select %p47, %s48, %s49
      %p53 = pneg %p47
      %p54 = scmp.eq.s32.totalorder %s38, 5
      %p55 = por %p53, %p54
      %p56 = scmp.ne.s32.totalorder %s48, %s51
      %p57 = scmp.eq.s32.totalorder %s38, 0
      %p58 = por %p56, %p57
      %p59 = scmp.ne.s32.totalorder %s48, %s51
      %p60 = scmp.eq.s32.totalorder %s43, 5
      %p61 = por %p59, %p60
      %p62 = scmp.ne.s32.totalorder %s51, %s52
      %p63 = scmp.eq.s32.totalorder %s43, 0
      %p64 = por %p62, %p63
      %p65 = scmp.ne.s32.totalorder %s51, %s52
      %p66 = scmp.eq.s32.totalorder %s44, 5
      %p67 = por %p65, %p66
      %p69 = scmp.ne.s32.totalorder %s52, %s68
      %p70 = scmp.eq.s32.totalorder %s44, 0
      %p71 = por %p69, %p70
      %s73 = sadd.s32 %s72, 1
      %p76 = scmp.eq.s32.totalorder %s38, 5
      %p77 = scmp.ne.s32.totalorder %s72, %s74
      %p78 = scmp.eq.s32.totalorder %s38, 0
      %p79 = por %p77, %p78
      %p80 = scmp.ne.s32.totalorder %s72, %s74
      %p81 = scmp.eq.s32.totalorder %s43, 5
      %p82 = por %p80, %p81
      %p83 = scmp.ne.s32.totalorder %s74, %s75
      %p84 = scmp.eq.s32.totalorder %s43, 0
      %p85 = por %p83, %p84
      %p86 = scmp.ne.s32.totalorder %s74, %s75
      %p87 = scmp.eq.s32.totalorder %s44, 5
      %p88 = por %p86, %p87
      %p90 = scmp.ne.s32.totalorder %s75, %s89
      %p91 = scmp.eq.s32.totalorder %s44, 0
      %p92 = por %p90, %p91
      %s94 = sadd.s32 %s93, 1
      %p97 = scmp.eq.s32.totalorder %s38, 5
      %p98 = scmp.ne.s32.totalorder %s93, %s95
      %p99 = scmp.eq.s32.totalorder %s38, 0
      %p100 = por %p98, %p99
      %p101 = scmp.ne.s32.totalorder %s93, %s95
      %p102 = scmp.eq.s32.totalorder %s43, 5
      %p103 = por %p101, %p102
      %p104 = scmp.ne.s32.totalorder %s95, %s96
      %p105 = scmp.eq.s32.totalorder %s43, 0
      %p106 = por %p104, %p105
      %p107 = scmp.ne.s32.totalorder %s95, %s96
      %p108 = scmp.eq.s32.totalorder %s44, 5
      %p109 = por %p107, %p108
      %p111 = scmp.ne.s32.totalorder %s96, %s110
      %p112 = scmp.eq.s32.totalorder %s44, 0
      %p113 = por %p111, %p112
      %s115 = sadd.s32 %s114, 1
      %p118 = scmp.eq.s32.totalorder %s38, 5
      %p119 = scmp.ne.s32.totalorder %s114, %s116
      %p120 = scmp.eq.s32.totalorder %s38, 0
      %p121 = por %p119, %p120
      %p122 = scmp.ne.s32.totalorder %s114, %s116
      %p123 = scmp.eq.s32.totalorder %s43, 5
      %p124 = por %p122, %p123
      %p125 = scmp.ne.s32.totalorder %s116, %s117
      %p126 = scmp.eq.s32.totalorder %s43, 0
      %p127 = por %p125, %p126
      %p128 = scmp.ne.s32.totalorder %s116, %s117
      %p129 = scmp.eq.s32.totalorder %s44, 5
      %p130 = por %p128, %p129
      %p132 = scmp.ne.s32.totalorder %s117, %s131
      %p133 = scmp.eq.s32.totalorder %s44, 0
      %p134 = por %p132, %p133
      %s136 = sadd.s32 %s135, 1
      %p139 = scmp.eq.s32.totalorder %s38, 5
      %p140 = scmp.ne.s32.totalorder %s135, %s137
      %p141 = scmp.eq.s32.totalorder %s38, 0
      %p142 = por %p140, %p141
      %p143 = scmp.ne.s32.totalorder %s135, %s137
      %p144 = scmp.eq.s32.totalorder %s43, 5
      %p145 = por %p143, %p144
      %p146 = scmp.ne.s32.totalorder %s137, %s138
      %p147 = scmp.eq.s32.totalorder %s43, 0
      %p148 = por %p146, %p147
      %p149 = scmp.ne.s32.totalorder %s137, %s138
      %p150 = scmp.eq.s32.totalorder %s44, 5
      %p151 = por %p149, %p150
      %p153 = scmp.ne.s32.totalorder %s138, %s152
      %p154 = scmp.eq.s32.totalorder %s44, 0
      %p155 = por %p153, %p154
      %s157 = sadd.s32 %s156, 1
      %p160 = scmp.eq.s32.totalorder %s38, 5
      %p161 = scmp.ne.s32.totalorder %s156, %s158
      %p162 = scmp.eq.s32.totalorder %s38, 0
      %p163 = por %p161, %p162
      %p164 = scmp.ne.s32.totalorder %s156, %s158
      %p165 = scmp.eq.s32.totalorder %s43, 5
      %p166 = por %p164, %p165
      %p167 = scmp.ne.s32.totalorder %s158, %s159
      %p168 = scmp.eq.s32.totalorder %s43, 0
      %p169 = por %p167, %p168
      %p170 = scmp.ne.s32.totalorder %s158, %s159
      %p171 = scmp.eq.s32.totalorder %s44, 5
      %p172 = por %p170, %p171
      %p174 = scmp.ne.s32.totalorder %s159, %s173
      %p175 = scmp.eq.s32.totalorder %s44, 0
      %p176 = por %p174, %p175
      %s178 = sadd.s32 %s177, 1
      %p181 = scmp.eq.s32.totalorder %s38, 5
      %p182 = scmp.ne.s32.totalorder %s177, %s179
      %p183 = scmp.eq.s32.totalorder %s38, 0
      %p184 = por %p182, %p183
      %p185 = scmp.ne.s32.totalorder %s177, %s179
      %p186 = scmp.eq.s32.totalorder %s43, 5
      %p187 = por %p185, %p186
      %p188 = scmp.ne.s32.totalorder %s179, %s180
      %p189 = scmp.eq.s32.totalorder %s43, 0
      %p190 = por %p188, %p189
      %p191 = scmp.ne.s32.totalorder %s179, %s180
      %p192 = scmp.eq.s32.totalorder %s44, 5
      %p193 = por %p191, %p192
      %p195 = scmp.ne.s32.totalorder %s180, %s194
      %p196 = scmp.eq.s32.totalorder %s44, 0
      %p197 = por %p195, %p196
      %s199 = sadd.s32 %s198, 1
      %p202 = scmp.eq.s32.totalorder %s38, 5
      %p203 = scmp.ne.s32.totalorder %s198, %s200
      %p204 = scmp.eq.s32.totalorder %s38, 0
      %p205 = por %p203, %p204
      %p206 = scmp.ne.s32.totalorder %s198, %s200
      %p207 = scmp.eq.s32.totalorder %s43, 5
      %p208 = por %p206, %p207
      %p209 = scmp.ne.s32.totalorder %s200, %s201
      %p210 = scmp.eq.s32.totalorder %s43, 0
      %p211 = por %p209, %p210
      %p212 = scmp.ne.s32.totalorder %s200, %s201
      %p213 = scmp.eq.s32.totalorder %s44, 5
      %p214 = por %p212, %p213
      %p216 = scmp.ne.s32.totalorder %s201, %s215
      %p217 = scmp.eq.s32.totalorder %s44, 0
      %p218 = por %p216, %p217
      %s220 = sadd.s32 %s219, 1
      %p223 = scmp.eq.s32.totalorder %s38, 5
      %p224 = scmp.ne.s32.totalorder %s219, %s221
      %p225 = scmp.eq.s32.totalorder %s38, 0
      %p226 = por %p224, %p225
      %p227 = scmp.ne.s32.totalorder %s219, %s221
      %p228 = scmp.eq.s32.totalorder %s43, 5
      %p229 = por %p227, %p228
      %p230 = scmp.ne.s32.totalorder %s221, %s222
      %p231 = scmp.eq.s32.totalorder %s43, 0
      %p232 = por %p230, %p231
      %p233 = scmp.ne.s32.totalorder %s221, %s222
      %p234 = scmp.eq.s32.totalorder %s44, 5
      %p235 = por %p233, %p234
      %p237 = scmp.ne.s32.totalorder %s222, %s236
      %p238 = scmp.eq.s32.totalorder %s44, 0
      %p239 = por %p237, %p238
      %s241 = sadd.s32 %s240, 1
      %p244 = scmp.eq.s32.totalorder %s38, 5
      %p245 = scmp.ne.s32.totalorder %s240, %s242
      %p246 = scmp.eq.s32.totalorder %s38, 0
      %p247 = por %p245, %p246
      %p248 = scmp.ne.s32.totalorder %s240, %s242
      %p249 = scmp.eq.s32.totalorder %s43, 5
      %p250 = por %p248, %p249
      %p251 = scmp.ne.s32.totalorder %s242, %s243
      %p252 = scmp.eq.s32.totalorder %s43, 0
      %p253 = por %p251, %p252
      %p254 = scmp.ne.s32.totalorder %s242, %s243
      %p255 = scmp.eq.s32.totalorder %s44, 5
      %p256 = por %p254, %p255
      %p258 = scmp.ne.s32.totalorder %s243, %s257
      %p259 = scmp.eq.s32.totalorder %s44, 0
      %p260 = por %p258, %p259
      %s262 = sadd.s32 %s261, 1
      %p265 = scmp.eq.s32.totalorder %s38, 5
      %p266 = scmp.ne.s32.totalorder %s261, %s263
      %p267 = scmp.eq.s32.totalorder %s38, 0
      %p268 = por %p266, %p267
      %p269 = scmp.ne.s32.totalorder %s261, %s263
      %p270 = scmp.eq.s32.totalorder %s43, 5
      %p271 = por %p269, %p270
      %p272 = scmp.ne.s32.totalorder %s263, %s264
      %p273 = scmp.eq.s32.totalorder %s43, 0
      %p274 = por %p272, %p273
      %p275 = scmp.ne.s32.totalorder %s263, %s264
      %p276 = scmp.eq.s32.totalorder %s44, 5
      %p277 = por %p275, %p276
      %p279 = scmp.ne.s32.totalorder %s264, %s278
      %p280 = scmp.eq.s32.totalorder %s44, 0
      %p281 = por %p279, %p280
      %s283 = sadd.s32 %s282, 1
      %p286 = scmp.eq.s32.totalorder %s38, 5
      %p287 = scmp.ne.s32.totalorder %s282, %s284
      %p288 = scmp.eq.s32.totalorder %s38, 0
      %p289 = por %p287, %p288
      %p290 = scmp.ne.s32.totalorder %s282, %s284
      %p291 = scmp.eq.s32.totalorder %s43, 5
      %p292 = por %p290, %p291
      %p293 = scmp.ne.s32.totalorder %s284, %s285
      %p294 = scmp.eq.s32.totalorder %s43, 0
      %p295 = por %p293, %p294
      %p296 = scmp.ne.s32.totalorder %s284, %s285
      %p297 = scmp.eq.s32.totalorder %s44, 5
      %p298 = por %p296, %p297
      %p300 = scmp.ne.s32.totalorder %s285, %s299
      %p301 = scmp.eq.s32.totalorder %s44, 0
      %p302 = por %p300, %p301
      %s304 = sadd.s32 %s303, 1
      %p307 = scmp.eq.s32.totalorder %s38, 5
      %p308 = scmp.ne.s32.totalorder %s303, %s305
      %p309 = scmp.eq.s32.totalorder %s38, 0
      %p310 = por %p308, %p309
      %p311 = scmp.ne.s32.totalorder %s303, %s305
      %p312 = scmp.eq.s32.totalorder %s43, 5
      %p313 = por %p311, %p312
      %p314 = scmp.ne.s32.totalorder %s305, %s306
      %p315 = scmp.eq.s32.totalorder %s43, 0
      %p316 = por %p314, %p315
      %p317 = scmp.ne.s32.totalorder %s305, %s306
      %p318 = scmp.eq.s32.totalorder %s44, 5
      %p319 = por %p317, %p318
      %p321 = scmp.ne.s32.totalorder %s306, %s320
      %p322 = scmp.eq.s32.totalorder %s44, 0
      %p323 = por %p321, %p322
      %s325 = sadd.s32 %s324, 1
      %p328 = scmp.eq.s32.totalorder %s38, 5
      %p329 = scmp.ne.s32.totalorder %s324, %s326
      %p330 = scmp.eq.s32.totalorder %s38, 0
      %p331 = por %p329, %p330
      %p332 = scmp.ne.s32.totalorder %s324, %s326
      %p333 = scmp.eq.s32.totalorder %s43, 5
      %p334 = por %p332, %p333
      %p335 = scmp.ne.s32.totalorder %s326, %s327
      %p336 = scmp.eq.s32.totalorder %s43, 0
      %p337 = por %p335, %p336
      %p338 = scmp.ne.s32.totalorder %s326, %s327
      %p339 = scmp.eq.s32.totalorder %s44, 5
      %p340 = por %p338, %p339
      %p342 = scmp.ne.s32.totalorder %s327, %s341
      %p343 = scmp.eq.s32.totalorder %s44, 0
      %p344 = por %p342, %p343
      %s346 = sadd.s32 %s345, 1
      %p349 = scmp.eq.s32.totalorder %s38, 5
      %p350 = scmp.ne.s32.totalorder %s345, %s347
      %p351 = scmp.eq.s32.totalorder %s38, 0
      %p352 = por %p350, %p351
      %p353 = scmp.ne.s32.totalorder %s345, %s347
      %p354 = scmp.eq.s32.totalorder %s43, 5
      %p355 = por %p353, %p354
      %p356 = scmp.ne.s32.totalorder %s347, %s348
      %p357 = scmp.eq.s32.totalorder %s43, 0
      %p358 = por %p356, %p357
      %p359 = scmp.ne.s32.totalorder %s347, %s348
      %p360 = scmp.eq.s32.totalorder %s44, 5
      %p361 = por %p359, %p360
      %p363 = scmp.ne.s32.totalorder %s348, %s362
      %p364 = scmp.eq.s32.totalorder %s44, 0
      %p365 = por %p363, %p364
      %s367 = sadd.s32 %s366, 1
      %p370 = scmp.eq.s32.totalorder %s38, 5
      %p371 = scmp.ne.s32.totalorder %s366, %s368
      %p372 = scmp.eq.s32.totalorder %s38, 0
      %p373 = por %p371, %p372
      %p374 = scmp.ne.s32.totalorder %s366, %s368
      %p375 = scmp.eq.s32.totalorder %s43, 5
      %p376 = por %p374, %p375
      %p377 = scmp.ne.s32.totalorder %s368, %s369
      %p378 = scmp.eq.s32.totalorder %s43, 0
      %p379 = por %p377, %p378
      %p380 = scmp.ne.s32.totalorder %s368, %s369
      %p381 = scmp.eq.s32.totalorder %s44, 5
      %p382 = por %p380, %p381
      %p384 = scmp.ne.s32.totalorder %s369, %s383
      %p385 = scmp.eq.s32.totalorder %s44, 0
      %p386 = por %p384, %p385
      %s388 = sadd.s32 %s387, 1
      %p391 = scmp.eq.s32.totalorder %s38, 5
      %p392 = scmp.ne.s32.totalorder %s387, %s389
      %p393 = scmp.eq.s32.totalorder %s38, 0
      %p394 = por %p392, %p393
      %p395 = scmp.ne.s32.totalorder %s387, %s389
      %p396 = scmp.eq.s32.totalorder %s43, 5
      %p397 = por %p395, %p396
      %p398 = scmp.ne.s32.totalorder %s389, %s390
      %p399 = scmp.eq.s32.totalorder %s43, 0
      %p400 = por %p398, %p399
      %p401 = scmp.ne.s32.totalorder %s389, %s390
      %p402 = scmp.eq.s32.totalorder %s44, 5
      %p403 = por %p401, %p402
      %p405 = scmp.ne.s32.totalorder %s390, %s404
      %p406 = scmp.eq.s32.totalorder %s44, 0
      %p407 = por %p405, %p406
      %s408 = ssub.s32 %s38, %s45
      %p409 = scmp.eq.s32.totalorder %s408, 0
      %s411 = sadd.s32 %s410, 1
      %s412 = scalar_select %p409, %s410, %s411
      %p415 = pneg %p409
      %p416 = scmp.eq.s32.totalorder %s38, 5
      %p417 = por %p415, %p416
      %p418 = scmp.ne.s32.totalorder %s410, %s413
      %p419 = scmp.eq.s32.totalorder %s38, 0
      %p420 = por %p418, %p419
      %p421 = scmp.ne.s32.totalorder %s410, %s413
      %p422 = scmp.eq.s32.totalorder %s43, 5
      %p423 = por %p421, %p422
      %p424 = scmp.ne.s32.totalorder %s413, %s414
      %p425 = scmp.eq.s32.totalorder %s43, 0
      %p426 = por %p424, %p425
      %p427 = scmp.ne.s32.totalorder %s413, %s414
      %p428 = scmp.eq.s32.totalorder %s44, 5
      %p429 = por %p427, %p428
      %p431 = scmp.ne.s32.totalorder %s414, %s430
      %p432 = scmp.eq.s32.totalorder %s44, 0
      %p433 = por %p431, %p432
      %s435 = sadd.s32 %s434, 1
      %p438 = scmp.eq.s32.totalorder %s38, 5
      %p439 = scmp.ne.s32.totalorder %s434, %s436
      %p440 = scmp.eq.s32.totalorder %s38, 0
      %p441 = por %p439, %p440
      %p442 = scmp.ne.s32.totalorder %s434, %s436
      %p443 = scmp.eq.s32.totalorder %s43, 5
      %p444 = por %p442, %p443
      %p445 = scmp.ne.s32.totalorder %s436, %s437
      %p446 = scmp.eq.s32.totalorder %s43, 0
      %p447 = por %p445, %p446
      %p448 = scmp.ne.s32.totalorder %s436, %s437
      %p449 = scmp.eq.s32.totalorder %s44, 5
      %p450 = por %p448, %p449
      %p452 = scmp.ne.s32.totalorder %s437, %s451
      %p453 = scmp.eq.s32.totalorder %s44, 0
      %p454 = por %p452, %p453
      %p455 = scmp.le.s32.totalorder 1, %s38
      %p456 = scmp.lt.s32.totalorder %s38, 7
      %p457 = pnand %p455, %p456
      %p458 = pneg %p457
      // Predicated region
      $region9: #{bahdanau_decode.1} parent=5 // pred_check
        _
      $region10: #{bahdanau_decode.1} parent=5 // pred_check_branch
        %460 = sbr.rel (%p457) target = $region12
      $region11: #{bahdanau_decode.1} parent=5 // pred_region
        %s461 = ssub.s32 %s38, 1
        // Predicated region
        $region13: #{bahdanau_decode.1} parent=11 // pred_check
          %p462 = pneg %p85
        $region14: #{bahdanau_decode.1} parent=11 // pred_check_branch
          %464 = sbr.rel (%p462) target = $region16
        $region15: #{bahdanau_decode.1} parent=11 // pred_region
          %466 = vsyncadd [#allocation6], 0
          %s467 = sshll.u32 %s1, 4
          %s468 = int_to_ptr.hbm [resolvable:$true] %s467
          %s469 = sshll.u32 [#allocation5], 4
          %s470 = int_to_ptr.vmem [resolvable:$true] %s469
          %475 = dma.hbm_to_vmem [thread:$0]  %s468, 256, %s470, [#allocation6], 128, 128, 8
        $region16: #{bahdanau_decode.1} parent=11 // pred_fallthru
          _
        // Predicated region
        $region17: #{bahdanau_decode.1} parent=11 // pred_check
          %p476 = pneg %p106
        $region18: #{bahdanau_decode.1} parent=11 // pred_check_branch
          %478 = sbr.rel (%p476) target = $region20
        $region19: #{bahdanau_decode.1} parent=11 // pred_region
          %480 = vsyncadd [#allocation6], 0
          %s481 = sshll.u32 %s2, 4
          %s482 = int_to_ptr.hbm [resolvable:$true] %s481
          %s483 = sshll.u32 [#allocation7], 4
          %s484 = int_to_ptr.vmem [resolvable:$true] %s483
          %489 = dma.hbm_to_vmem [thread:$0]  %s482, 1024, %s484, [#allocation6], 64, 64, 4
        $region20: #{bahdanau_decode.1} parent=11 // pred_fallthru
          _
        // Predicated region
        $region21: #{bahdanau_decode.1} parent=11 // pred_check
          %p490 = pneg %p127
        $region22: #{bahdanau_decode.1} parent=11 // pred_check_branch
          %492 = sbr.rel (%p490) target = $region24
        $region23: #{bahdanau_decode.1} parent=11 // pred_region
          %494 = vsyncadd [#allocation9], 0
          %s495 = sshll.u32 %s3, 4
          %s496 = int_to_ptr.hbm [resolvable:$true] %s495
          %s497 = sshll.u32 [#allocation8], 4
          %s498 = int_to_ptr.vmem [resolvable:$true] %s497
          %503 = dma.hbm_to_vmem [thread:$0]  %s496, 3072, %s498, [#allocation9], 192, 192, 12
        $region24: #{bahdanau_decode.1} parent=11 // pred_fallthru
          _
        // Predicated region
        $region25: #{bahdanau_decode.1} parent=11 // pred_check
          %p504 = pneg %p148
        $region26: #{bahdanau_decode.1} parent=11 // pred_check_branch
          %506 = sbr.rel (%p504) target = $region28
        $region27: #{bahdanau_decode.1} parent=11 // pred_region
          %508 = vsyncadd [#allocation9], 0
          %s509 = sshll.u32 %s4, 4
          %s510 = int_to_ptr.hbm [resolvable:$true] %s509
          %s511 = sshll.u32 [#allocation10], 4
          %s512 = int_to_ptr.vmem [resolvable:$true] %s511
          %517 = dma.hbm_to_vmem [thread:$0]  %s510, 1024, %s512, [#allocation9], 64, 64, 4
        $region28: #{bahdanau_decode.1} parent=11 // pred_fallthru
          _
        // Predicated region
        $region29: #{bahdanau_decode.1} parent=11 // pred_check
          %p518 = pneg %p169
        $region30: #{bahdanau_decode.1} parent=11 // pred_check_branch
          %520 = sbr.rel (%p518) target = $region32
        $region31: #{bahdanau_decode.1} parent=11 // pred_region
          %522 = vsyncadd [#allocation12], 0
          %s524 = sshll.u32 %s5, 4
          %s525 = int_to_ptr.hbm [resolvable:$true] %s524
          %s526 = sshll.u32 [#allocation11], 4
          %s527 = int_to_ptr.vmem [resolvable:$true] %s526
          %529 = dma.hbm_to_vmem [thread:$0]  %s525, 16, %s527, [#allocation12]
        $region32: #{bahdanau_decode.1} parent=11 // pred_fallthru
          _
        // Predicated region
        $region33: #{bahdanau_decode.1} parent=11 // pred_check
          %p530 = pneg %p190
        $region34: #{bahdanau_decode.1} parent=11 // pred_check_branch
          %532 = sbr.rel (%p530) target = $region36
        $region35: #{bahdanau_decode.1} parent=11 // pred_region
          _
        $region36: #{bahdanau_decode.1} parent=11 // pred_fallthru
          _
        // Predicated region
        $region37: #{bahdanau_decode.1} parent=11 // pred_check
          %p533 = pneg %p211
        $region38: #{bahdanau_decode.1} parent=11 // pred_check_branch
          %535 = sbr.rel (%p533) target = $region40
        $region39: #{bahdanau_decode.1} parent=11 // pred_region
          %537 = vsyncadd [#allocation12], 0
          %s538 = sshll.u32 %s7, 4
          %s539 = int_to_ptr.hbm [resolvable:$true] %s538
          %s540 = sshll.u32 [#allocation13], 4
          %s541 = int_to_ptr.vmem [resolvable:$true] %s540
          %546 = dma.hbm_to_vmem [thread:$0]  %s539, 4096, %s541, [#allocation12], 256, 256, 16
        $region40: #{bahdanau_decode.1} parent=11 // pred_fallthru
          _
        // Predicated region
        $region41: #{bahdanau_decode.1} parent=11 // pred_check
          %p547 = pneg %p232
        $region42: #{bahdanau_decode.1} parent=11 // pred_check_branch
          %549 = sbr.rel (%p547) target = $region44
        $region43: #{bahdanau_decode.1} parent=11 // pred_region
          %551 = vsyncadd [#allocation15], 0
          %s552 = sshll.u32 %s8, 4
          %s553 = int_to_ptr.hbm [resolvable:$true] %s552
          %s554 = sshll.u32 [#allocation14], 4
          %s555 = int_to_ptr.vmem [resolvable:$true] %s554
          %560 = dma.hbm_to_vmem [thread:$0]  %s553, 3072, %s555, [#allocation15], 192, 192, 12
        $region44: #{bahdanau_decode.1} parent=11 // pred_fallthru
          _
        // Predicated region
        $region45: #{bahdanau_decode.1} parent=11 // pred_check
          %p561 = pneg %p253
        $region46: #{bahdanau_decode.1} parent=11 // pred_check_branch
          %563 = sbr.rel (%p561) target = $region48
        $region47: #{bahdanau_decode.1} parent=11 // pred_region
          _
        $region48: #{bahdanau_decode.1} parent=11 // pred_fallthru
          _
        // Predicated region
        $region49: #{bahdanau_decode.1} parent=11 // pred_check
          %p564 = pneg %p274
        $region50: #{bahdanau_decode.1} parent=11 // pred_check_branch
          %566 = sbr.rel (%p564) target = $region52
        $region51: #{bahdanau_decode.1} parent=11 // pred_region
          %568 = vsyncadd [#allocation15], 0
          %s569 = sshll.u32 %s10, 4
          %s570 = int_to_ptr.hbm [resolvable:$true] %s569
          %s571 = sshll.u32 [#allocation16], 4
          %s572 = int_to_ptr.vmem [resolvable:$true] %s571
          %577 = dma.hbm_to_vmem [thread:$0]  %s570, 3072, %s572, [#allocation15], 192, 192, 12
        $region52: #{bahdanau_decode.1} parent=11 // pred_fallthru
          _
        // Predicated region
        $region53: #{bahdanau_decode.1} parent=11 // pred_check
          %p578 = pneg %p295
        $region54: #{bahdanau_decode.1} parent=11 // pred_check_branch
          %580 = sbr.rel (%p578) target = $region56
        $region55: #{bahdanau_decode.1} parent=11 // pred_region
          %582 = vsyncadd [#allocation18], 0
          %s584 = sshll.u32 %s11, 4
          %s585 = int_to_ptr.hbm [resolvable:$true] %s584
          %s586 = sshll.u32 [#allocation17], 4
          %s587 = int_to_ptr.vmem [resolvable:$true] %s586
          %589 = dma.hbm_to_vmem [thread:$0]  %s585, 48, %s587, [#allocation18]
        $region56: #{bahdanau_decode.1} parent=11 // pred_fallthru
          _
        // Predicated region
        $region57: #{bahdanau_decode.1} parent=11 // pred_check
          %p590 = pneg %p316
        $region58: #{bahdanau_decode.1} parent=11 // pred_check_branch
          %592 = sbr.rel (%p590) target = $region60
        $region59: #{bahdanau_decode.1} parent=11 // pred_region
          %594 = vsyncadd [#allocation18], 0
          %s595 = sshll.u32 %s12, 4
          %s596 = int_to_ptr.hbm [resolvable:$true] %s595
          %s597 = sshll.u32 [#allocation19], 4
          %s598 = int_to_ptr.vmem [resolvable:$true] %s597
          %603 = dma.hbm_to_vmem [thread:$0]  %s596, 3072, %s598, [#allocation18], 192, 192, 12
        $region60: #{bahdanau_decode.1} parent=11 // pred_fallthru
          _
        // Predicated region
        $region61: #{bahdanau_decode.1} parent=11 // pred_check
          %p604 = pneg %p337
        $region62: #{bahdanau_decode.1} parent=11 // pred_check_branch
          %606 = sbr.rel (%p604) target = $region64
        $region63: #{bahdanau_decode.1} parent=11 // pred_region
          _
        $region64: #{bahdanau_decode.1} parent=11 // pred_fallthru
          _
        // Predicated region
        $region65: #{bahdanau_decode.1} parent=11 // pred_check
          %p607 = pneg %p358
        $region66: #{bahdanau_decode.1} parent=11 // pred_check_branch
          %609 = sbr.rel (%p607) target = $region68
        $region67: #{bahdanau_decode.1} parent=11 // pred_region
          %611 = vsyncadd [#allocation21], 0
          %s613 = sshll.u32 %s14, 4
          %s614 = int_to_ptr.hbm [resolvable:$true] %s613
          %s615 = sshll.u32 [#allocation20], 4
          %s616 = int_to_ptr.vmem [resolvable:$true] %s615
          %618 = dma.hbm_to_vmem [thread:$0]  %s614, 48, %s616, [#allocation21]
        $region68: #{bahdanau_decode.1} parent=11 // pred_fallthru
          _
        // Predicated region
        $region69: #{bahdanau_decode.1} parent=11 // pred_check
          %p619 = pneg %p379
        $region70: #{bahdanau_decode.1} parent=11 // pred_check_branch
          %621 = sbr.rel (%p619) target = $region72
        $region71: #{bahdanau_decode.1} parent=11 // pred_region
          %623 = vsyncadd [#allocation21], 0
          %s624 = sshll.u32 %s15, 4
          %s625 = int_to_ptr.hbm [resolvable:$true] %s624
          %s626 = sshll.u32 [#allocation22], 4
          %s627 = int_to_ptr.vmem [resolvable:$true] %s626
          %632 = dma.hbm_to_vmem [thread:$0]  %s625, 1024, %s627, [#allocation21], 64, 64, 4
        $region72: #{bahdanau_decode.1} parent=11 // pred_fallthru
          _
        // Predicated region
        $region73: #{bahdanau_decode.1} parent=11 // pred_check
          %p633 = pneg %p400
        $region74: #{bahdanau_decode.1} parent=11 // pred_check_branch
          %635 = sbr.rel (%p633) target = $region76
        $region75: #{bahdanau_decode.1} parent=11 // pred_region
          _
        $region76: #{bahdanau_decode.1} parent=11 // pred_fallthru
          _
      $region12: #{bahdanau_decode.1} parent=5 // pred_fallthru
        _
      %p636 = scmp.lt.s32.totalorder %s38, 6
      // Predicated region
      $region77: #{bahdanau_decode.1} parent=5 // pred_check
        %p637 = pneg %p636
      $region78: #{bahdanau_decode.1} parent=5 // pred_check_branch
        %639 = sbr.rel (%p637) target = $region80
      $region79: #{bahdanau_decode.1} parent=5 // pred_region
        // Predicated region
        $region81: #{bahdanau_decode.1} parent=79 // pred_check
          %p640 = pneg %p58
        $region82: #{bahdanau_decode.1} parent=79 // pred_check_branch
          %642 = sbr.rel (%p640) target = $region84
        $region83: #{bahdanau_decode.1} parent=79 // pred_region
          %s643 = sand.u32 %s48, 1
          %s644 = scalar_lea.sflag [#allocation3], %s643
          %s645 = sand.u32 %s48, 1
          %s646 = smul.addr %s645, 4
          %s647 = scalar_lea.vmem [#allocation2], %s646
          %649 = vsyncadd %s644, 0
          %s650 = smul.addr %s38, 4
          %s651 = scalar_lea.hbm %s0, %s650
          %s653 = sshll.u32 %s651, 4
          %s654 = int_to_ptr.hbm [resolvable:$true] %s653
          %s655 = sshll.u32 %s647, 4
          %s656 = int_to_ptr.vmem [resolvable:$true] %s655
          %658 = dma.hbm_to_vmem [thread:$0]  %s654, 64, %s656, %s644
        $region84: #{bahdanau_decode.1} parent=79 // pred_fallthru
          _
      $region80: #{bahdanau_decode.1} parent=5 // pred_fallthru
        _
      %p659 = scmp.le.s32.totalorder 1, %s38
      %p660 = scmp.lt.s32.totalorder %s38, 7
      %p661 = pnand %p659, %p660
      %p662 = pneg %p661
      // Predicated region
      $region85: #{bahdanau_decode.1} parent=5 // pred_check
        _
      $region86: #{bahdanau_decode.1} parent=5 // pred_check_branch
        %664 = sbr.rel (%p661) target = $region88
      $region87: #{bahdanau_decode.1} parent=5 // pred_region
        %s665 = ssub.s32 %s38, 1
        %s666 = sand.u32 %s51, 1
        %s667 = scalar_lea.sflag [#allocation3], %s666
        %s668 = sand.u32 %s51, 1
        %s669 = smul.addr %s668, 4
        %s670 = scalar_lea.vmem [#allocation2], %s669
        // Predicated region
        $region89: #{bahdanau_decode.1} parent=87 // pred_check
          %p671 = pneg %p64
        $region90: #{bahdanau_decode.1} parent=87 // pred_check_branch
          %673 = sbr.rel (%p671) target = $region92
        $region91: #{bahdanau_decode.1} parent=87 // pred_region
          %675 = dma.done %s667, 64
        $region92: #{bahdanau_decode.1} parent=87 // pred_fallthru
          _
        // Predicated region
        $region93: #{bahdanau_decode.1} parent=87 // pred_check
          %p676 = pneg %p85
        $region94: #{bahdanau_decode.1} parent=87 // pred_check_branch
          %678 = sbr.rel (%p676) target = $region96
        $region95: #{bahdanau_decode.1} parent=87 // pred_region
          %680 = dma.done [#allocation6], 256
        $region96: #{bahdanau_decode.1} parent=87 // pred_fallthru
          _
        // Predicated region
        $region97: #{bahdanau_decode.1} parent=87 // pred_check
          %p681 = pneg %p106
        $region98: #{bahdanau_decode.1} parent=87 // pred_check_branch
          %683 = sbr.rel (%p681) target = $region100
        $region99: #{bahdanau_decode.1} parent=87 // pred_region
          %685 = dma.done [#allocation6], 1024
        $region100: #{bahdanau_decode.1} parent=87 // pred_fallthru
          _
        // Predicated region
        $region101: #{bahdanau_decode.1} parent=87 // pred_check
          %p686 = pneg %p127
        $region102: #{bahdanau_decode.1} parent=87 // pred_check_branch
          %688 = sbr.rel (%p686) target = $region104
        $region103: #{bahdanau_decode.1} parent=87 // pred_region
          %690 = dma.done [#allocation9], 3072
        $region104: #{bahdanau_decode.1} parent=87 // pred_fallthru
          _
        // Predicated region
        $region105: #{bahdanau_decode.1} parent=87 // pred_check
          %p691 = pneg %p148
        $region106: #{bahdanau_decode.1} parent=87 // pred_check_branch
          %693 = sbr.rel (%p691) target = $region108
        $region107: #{bahdanau_decode.1} parent=87 // pred_region
          %695 = dma.done [#allocation9], 1024
        $region108: #{bahdanau_decode.1} parent=87 // pred_fallthru
          _
        // Predicated region
        $region109: #{bahdanau_decode.1} parent=87 // pred_check
          %p696 = pneg %p169
        $region110: #{bahdanau_decode.1} parent=87 // pred_check_branch
          %698 = sbr.rel (%p696) target = $region112
        $region111: #{bahdanau_decode.1} parent=87 // pred_region
          %700 = dma.done [#allocation12], 16
        $region112: #{bahdanau_decode.1} parent=87 // pred_fallthru
          _
        // Predicated region
        $region113: #{bahdanau_decode.1} parent=87 // pred_check
          %p701 = pneg %p211
        $region114: #{bahdanau_decode.1} parent=87 // pred_check_branch
          %703 = sbr.rel (%p701) target = $region116
        $region115: #{bahdanau_decode.1} parent=87 // pred_region
          %705 = dma.done [#allocation12], 4096
        $region116: #{bahdanau_decode.1} parent=87 // pred_fallthru
          _
        // Predicated region
        $region117: #{bahdanau_decode.1} parent=87 // pred_check
          %p706 = pneg %p232
        $region118: #{bahdanau_decode.1} parent=87 // pred_check_branch
          %708 = sbr.rel (%p706) target = $region120
        $region119: #{bahdanau_decode.1} parent=87 // pred_region
          %710 = dma.done [#allocation15], 3072
        $region120: #{bahdanau_decode.1} parent=87 // pred_fallthru
          _
        // Predicated region
        $region121: #{bahdanau_decode.1} parent=87 // pred_check
          %p711 = pneg %p274
        $region122: #{bahdanau_decode.1} parent=87 // pred_check_branch
          %713 = sbr.rel (%p711) target = $region124
        $region123: #{bahdanau_decode.1} parent=87 // pred_region
          %715 = dma.done [#allocation15], 3072
        $region124: #{bahdanau_decode.1} parent=87 // pred_fallthru
          _
        // Predicated region
        $region125: #{bahdanau_decode.1} parent=87 // pred_check
          %p716 = pneg %p295
        $region126: #{bahdanau_decode.1} parent=87 // pred_check_branch
          %718 = sbr.rel (%p716) target = $region128
        $region127: #{bahdanau_decode.1} parent=87 // pred_region
          %720 = dma.done [#allocation18], 48
        $region128: #{bahdanau_decode.1} parent=87 // pred_fallthru
          _
        // Predicated region
        $region129: #{bahdanau_decode.1} parent=87 // pred_check
          %p721 = pneg %p316
        $region130: #{bahdanau_decode.1} parent=87 // pred_check_branch
          %723 = sbr.rel (%p721) target = $region132
        $region131: #{bahdanau_decode.1} parent=87 // pred_region
          %725 = dma.done [#allocation18], 3072
        $region132: #{bahdanau_decode.1} parent=87 // pred_fallthru
          _
        // Predicated region
        $region133: #{bahdanau_decode.1} parent=87 // pred_check
          %p726 = pneg %p358
        $region134: #{bahdanau_decode.1} parent=87 // pred_check_branch
          %728 = sbr.rel (%p726) target = $region136
        $region135: #{bahdanau_decode.1} parent=87 // pred_region
          %730 = dma.done [#allocation21], 48
        $region136: #{bahdanau_decode.1} parent=87 // pred_fallthru
          _
        // Predicated region
        $region137: #{bahdanau_decode.1} parent=87 // pred_check
          %p731 = pneg %p379
        $region138: #{bahdanau_decode.1} parent=87 // pred_check_branch
          %733 = sbr.rel (%p731) target = $region140
        $region139: #{bahdanau_decode.1} parent=87 // pred_region
          %735 = dma.done [#allocation21], 1024
        $region140: #{bahdanau_decode.1} parent=87 // pred_fallthru
          _
        %s736 = sand.u32 %s51, 1
        %s737 = scalar_lea.sflag [#allocation3], %s736
        %s738 = sand.u32 %s51, 1
        %s739 = smul.addr %s738, 4
        %s740 = scalar_lea.vmem [#allocation2], %s739
        %p741 = pneg %p64
        %p742 = pneg %p61
        %p743 = pneg %p85
        %p744 = pneg %p82
        %p745 = pneg %p106
        %p746 = pneg %p103
        %p747 = pneg %p127
        %p748 = pneg %p124
        %p749 = pneg %p148
        %p750 = pneg %p145
        %p751 = pneg %p169
        %p752 = pneg %p166
        %p753 = pneg %p190
        %p754 = pneg %p187
        %p755 = pneg %p211
        %p756 = pneg %p208
        %p757 = pneg %p232
        %p758 = pneg %p229
        %p759 = pneg %p253
        %p760 = pneg %p250
        %p761 = pneg %p274
        %p762 = pneg %p271
        %p763 = pneg %p295
        %p764 = pneg %p292
        %p765 = pneg %p316
        %p766 = pneg %p313
        %p767 = pneg %p337
        %p768 = pneg %p334
        %p769 = pneg %p358
        %p770 = pneg %p355
        %p771 = pneg %p379
        %p772 = pneg %p376
        %p773 = pneg %p400
        %p774 = pneg %p397
        %p775 = pneg %p426
        %p776 = pneg %p423
        %s777 = sand.u32 %s413, 1
        %s778 = scalar_lea.sflag [#allocation4], %s777
        %s779 = sand.u32 %s413, 1
        %s780 = smul.addr %s779, 8
        %s781 = scalar_lea.vmem [#allocation23], %s780
        %p782 = pneg %p447
        %p783 = pneg %p444
        %p784 = scmp.eq.s32.totalorder %s43, 0
        // Predicated region
        $region141: #{bahdanau_decode.1} parent=87 // pred_check
          %p785 = pneg %p784
        $region142: #{bahdanau_decode.1} parent=87 // pred_check_branch
          %787 = sbr.rel (%p785) target = $region144
        $region143: #{bahdanau_decode.1} parent=87 // pred_region
          %v788 = vld [vmem:[#allocation5] sm:$0xff]
          %v789 = vld [vmem:[#allocation5 + $0x8] sm:$0xff]
          %790 = vst [vmem:[#allocation24] sm:$0xff] %v788
          %791 = vst [vmem:[#allocation24 + $0x8] sm:$0xff] %v789
        $region144: #{bahdanau_decode.1} parent=87 // pred_fallthru
          _
        %v792 = vld [vmem:[#allocation24] sm:$0xff]
        %s793 = scalar_lea.vmem [#allocation24], 8
        %v794 = vld [vmem:[%s793] sm:$0xff]
        %v795 = vld [vmem:[#allocation7] sm:$0xf]
        %v796 = vld [vmem:[#allocation7 + $0x4] sm:$0xf]
        %v797 = vld [vmem:[#allocation7 + $0x8] sm:$0xf]
        %v798 = vld [vmem:[#allocation7 + $0xc] sm:$0xf]
        %v799 = vld [vmem:[#allocation7 + $0x10] sm:$0xf]
        %v800 = vld [vmem:[#allocation7 + $0x14] sm:$0xf]
        %v801 = vld [vmem:[#allocation7 + $0x18] sm:$0xf]
        %v802 = vld [vmem:[#allocation7 + $0x1c] sm:$0xf]
        %v803 = vld [vmem:[#allocation7 + $0x20] sm:$0xf]
        %v804 = vld [vmem:[#allocation7 + $0x24] sm:$0xf]
        %v805 = vld [vmem:[#allocation7 + $0x28] sm:$0xf]
        %v806 = vld [vmem:[#allocation7 + $0x2c] sm:$0xf]
        %v807 = vld [vmem:[#allocation7 + $0x30] sm:$0xf]
        %v808 = vld [vmem:[#allocation7 + $0x34] sm:$0xf]
        %v809 = vld [vmem:[#allocation7 + $0x38] sm:$0xf]
        %v810 = vld [vmem:[#allocation7 + $0x3c] sm:$0xf]
        %v811 = vpack.c.bf16 %v794, %v794
        %v812 = vld [vmem:[#allocation13] sm:$0xff]
        %v813 = vld [vmem:[#allocation13 + $0x8] sm:$0xff]
        %v814 = vld [vmem:[#allocation13 + $0x10] sm:$0xff]
        %v815 = vld [vmem:[#allocation13 + $0x18] sm:$0xff]
        %v816 = vld [vmem:[#allocation13 + $0x20] sm:$0xff]
        %v817 = vld [vmem:[#allocation13 + $0x28] sm:$0xff]
        %v818 = vld [vmem:[#allocation13 + $0x30] sm:$0xff]
        %v819 = vld [vmem:[#allocation13 + $0x38] sm:$0xff]
        %v820 = vld [vmem:[#allocation13 + $0x40] sm:$0xff]
        %v821 = vld [vmem:[#allocation13 + $0x48] sm:$0xff]
        %v822 = vld [vmem:[#allocation13 + $0x50] sm:$0xff]
        %v823 = vld [vmem:[#allocation13 + $0x58] sm:$0xff]
        %v824 = vld [vmem:[#allocation13 + $0x60] sm:$0xff]
        %v825 = vld [vmem:[#allocation13 + $0x68] sm:$0xff]
        %v826 = vld [vmem:[#allocation13 + $0x70] sm:$0xff]
        %v827 = vld [vmem:[#allocation13 + $0x78] sm:$0xff]
        %v828 = vld [vmem:[#allocation13 + $0x80] sm:$0xff]
        %v829 = vld [vmem:[#allocation13 + $0x88] sm:$0xff]
        %v830 = vld [vmem:[#allocation13 + $0x90] sm:$0xff]
        %v831 = vld [vmem:[#allocation13 + $0x98] sm:$0xff]
        %v832 = vld [vmem:[#allocation13 + $0xa0] sm:$0xff]
        %v833 = vld [vmem:[#allocation13 + $0xa8] sm:$0xff]
        %v834 = vld [vmem:[#allocation13 + $0xb0] sm:$0xff]
        %v835 = vld [vmem:[#allocation13 + $0xb8] sm:$0xff]
        %v836 = vld [vmem:[#allocation13 + $0xc0] sm:$0xff]
        %v837 = vld [vmem:[#allocation13 + $0xc8] sm:$0xff]
        %v838 = vld [vmem:[#allocation13 + $0xd0] sm:$0xff]
        %v839 = vld [vmem:[#allocation13 + $0xd8] sm:$0xff]
        %v840 = vld [vmem:[#allocation13 + $0xe0] sm:$0xff]
        %v841 = vld [vmem:[#allocation13 + $0xe8] sm:$0xff]
        %v842 = vld [vmem:[#allocation13 + $0xf0] sm:$0xff]
        %v843 = vld [vmem:[#allocation13 + $0xf8] sm:$0xff]
        %v876 = vunpack.c.l.b16 %v812
        %v877 = vunpack.c.h.b16 %v812
        %v878 = vunpack.c.l.b16 %v813
        %v879 = vunpack.c.h.b16 %v813
        %v880 = vunpack.c.l.b16 %v814
        %v881 = vunpack.c.h.b16 %v814
        %v882 = vunpack.c.l.b16 %v815
        %v883 = vunpack.c.h.b16 %v815
        %v884 = vunpack.c.l.b16 %v816
        %v885 = vunpack.c.h.b16 %v816
        %v886 = vunpack.c.l.b16 %v817
        %v887 = vunpack.c.h.b16 %v817
        %v888 = vunpack.c.l.b16 %v818
        %v889 = vunpack.c.h.b16 %v818
        %v890 = vunpack.c.l.b16 %v819
        %v891 = vunpack.c.h.b16 %v819
        %v892 = vunpack.c.l.b16 %v820
        %v893 = vunpack.c.h.b16 %v820
        %v894 = vunpack.c.l.b16 %v821
        %v895 = vunpack.c.h.b16 %v821
        %v896 = vunpack.c.l.b16 %v822
        %v897 = vunpack.c.h.b16 %v822
        %v898 = vunpack.c.l.b16 %v823
        %v899 = vunpack.c.h.b16 %v823
        %v900 = vunpack.c.l.b16 %v824
        %v901 = vunpack.c.h.b16 %v824
        %v902 = vunpack.c.l.b16 %v825
        %v903 = vunpack.c.h.b16 %v825
        %v904 = vunpack.c.l.b16 %v826
        %v905 = vunpack.c.h.b16 %v826
        %v906 = vunpack.c.l.b16 %v827
        %v907 = vunpack.c.h.b16 %v827
        %v908 = vunpack.c.l.b16 %v828
        %v909 = vunpack.c.h.b16 %v828
        %v910 = vunpack.c.l.b16 %v829
        %v911 = vunpack.c.h.b16 %v829
        %v912 = vunpack.c.l.b16 %v830
        %v913 = vunpack.c.h.b16 %v830
        %v914 = vunpack.c.l.b16 %v831
        %v915 = vunpack.c.h.b16 %v831
        %v916 = vunpack.c.l.b16 %v832
        %v917 = vunpack.c.h.b16 %v832
        %v918 = vunpack.c.l.b16 %v833
        %v919 = vunpack.c.h.b16 %v833
        %v920 = vunpack.c.l.b16 %v834
        %v921 = vunpack.c.h.b16 %v834
        %v922 = vunpack.c.l.b16 %v835
        %v923 = vunpack.c.h.b16 %v835
        %v924 = vunpack.c.l.b16 %v836
        %v925 = vunpack.c.h.b16 %v836
        %v926 = vunpack.c.l.b16 %v837
        %v927 = vunpack.c.h.b16 %v837
        %v928 = vunpack.c.l.b16 %v838
        %v929 = vunpack.c.h.b16 %v838
        %v930 = vunpack.c.l.b16 %v839
        %v931 = vunpack.c.h.b16 %v839
        %v932 = vunpack.c.l.b16 %v840
        %v933 = vunpack.c.h.b16 %v840
        %v934 = vunpack.c.l.b16 %v841
        %v935 = vunpack.c.h.b16 %v841
        %v936 = vunpack.c.l.b16 %v842
        %v937 = vunpack.c.h.b16 %v842
        %v938 = vunpack.c.l.b16 %v843
        %v939 = vunpack.c.h.b16 %v843
        %v940 = vpack.c.b16 %v880, %v876
        %v941 = vpack.c.b16 %v881, %v877
        %v942 = vpack.c.b16 %v882, %v878
        %v943 = vpack.c.b16 %v883, %v879
        %v944 = vpack.c.b16 %v888, %v884
        %v945 = vpack.c.b16 %v889, %v885
        %v946 = vpack.c.b16 %v890, %v886
        %v947 = vpack.c.b16 %v891, %v887
        %v948 = vpack.c.b16 %v896, %v892
        %v949 = vpack.c.b16 %v897, %v893
        %v950 = vpack.c.b16 %v898, %v894
        %v951 = vpack.c.b16 %v899, %v895
        %v952 = vpack.c.b16 %v904, %v900
        %v953 = vpack.c.b16 %v905, %v901
        %v954 = vpack.c.b16 %v906, %v902
        %v955 = vpack.c.b16 %v907, %v903
        %v956 = vpack.c.b16 %v912, %v908
        %v957 = vpack.c.b16 %v913, %v909
        %v958 = vpack.c.b16 %v914, %v910
        %v959 = vpack.c.b16 %v915, %v911
        %v960 = vpack.c.b16 %v920, %v916
        %v961 = vpack.c.b16 %v921, %v917
        %v962 = vpack.c.b16 %v922, %v918
        %v963 = vpack.c.b16 %v923, %v919
        %v964 = vpack.c.b16 %v928, %v924
        %v965 = vpack.c.b16 %v929, %v925
        %v966 = vpack.c.b16 %v930, %v926
        %v967 = vpack.c.b16 %v931, %v927
        %v968 = vpack.c.b16 %v936, %v932
        %v969 = vpack.c.b16 %v937, %v933
        %v970 = vpack.c.b16 %v938, %v934
        %v971 = vpack.c.b16 %v939, %v935
        %1004 = vmatpush.bf16.msra.mxu0 %v968
        %1005 = vmatpush.bf16.msra.mxu0 %v964
        %1006 = vmatpush.bf16.msra.mxu0 %v960
        %1007 = vmatpush.bf16.msra.mxu0 %v956
        %1008 = vmatpush.bf16.msra.mxu0 %v952
        %1009 = vmatpush.bf16.msra.mxu0 %v948
        %1010 = vmatpush.bf16.msra.mxu0 %v944
        %1011 = vmatpush.bf16.msra.mxu0 %v940
        %1012 = vmatmul.bf16.gmra.mxu0 %v811
        %v1013 = vpop.f32.mrf.mxu0
        %v1014 = vadd.f32 0.0, %v1013
        %v1015 = vpop.f32.mrf.mxu0
        %1016 = vdwg.mxu0
        %1017 = vmatpush.bf16.msra.mxu0 %v969
        %1018 = vmatpush.bf16.msra.mxu0 %v965
        %1019 = vmatpush.bf16.msra.mxu0 %v961
        %1020 = vmatpush.bf16.msra.mxu0 %v957
        %1021 = vmatpush.bf16.msra.mxu0 %v953
        %1022 = vmatpush.bf16.msra.mxu0 %v949
        %1023 = vmatpush.bf16.msra.mxu0 %v945
        %1024 = vmatpush.bf16.msra.mxu0 %v941
        %1025 = vmatmul.bf16.gmra.mxu0 %v811
        %v1026 = vpop.f32.mrf.mxu0
        %v1027 = vadd.f32 0.0, %v1026
        %v1028 = vpop.f32.mrf.mxu0
        %1029 = vdwg.mxu0
        %1030 = vmatpush.bf16.msra.mxu0 %v970
        %1031 = vmatpush.bf16.msra.mxu0 %v966
        %1032 = vmatpush.bf16.msra.mxu0 %v962
        %1033 = vmatpush.bf16.msra.mxu0 %v958
        %1034 = vmatpush.bf16.msra.mxu0 %v954
        %1035 = vmatpush.bf16.msra.mxu0 %v950
        %1036 = vmatpush.bf16.msra.mxu0 %v946
        %1037 = vmatpush.bf16.msra.mxu0 %v942
        %1038 = vmatmul.bf16.gmra.mxu0 %v811
        %v1039 = vpop.f32.mrf.mxu0
        %v1040 = vadd.f32 0.0, %v1039
        %v1041 = vpop.f32.mrf.mxu0
        %1042 = vdwg.mxu0
        %1043 = vmatpush.bf16.msra.mxu0 %v971
        %1044 = vmatpush.bf16.msra.mxu0 %v967
        %1045 = vmatpush.bf16.msra.mxu0 %v963
        %1046 = vmatpush.bf16.msra.mxu0 %v959
        %1047 = vmatpush.bf16.msra.mxu0 %v955
        %1048 = vmatpush.bf16.msra.mxu0 %v951
        %1049 = vmatpush.bf16.msra.mxu0 %v947
        %1050 = vmatpush.bf16.msra.mxu0 %v943
        %1051 = vmatmul.bf16.gmra.mxu0 %v811
        %v1052 = vpop.f32.mrf.mxu0
        %v1053 = vadd.f32 0.0, %v1052
        %v1054 = vpop.f32.mrf.mxu0
        %1055 = vdwg.mxu0
        %v1056 = vld [vmem:[#allocation20] sm:$0x7]
        %v1058 = vperm.slane %v1056, 0
        %v1059 = vperm.slane %v1056, 1
        %v1060 = vperm.slane %v1056, 2
        %v1064 = vadd.f32 %v1027, %v1058
        %v1065 = vadd.f32 %v1040, %v1059
        %v1066 = vadd.f32 %v1053, %v1060
        %v1067 = vld [vmem:[#allocation10] sm:$0xf]
        %v1068 = vld [vmem:[#allocation10 + $0x4] sm:$0xf]
        %v1069 = vld [vmem:[#allocation10 + $0x8] sm:$0xf]
        %v1070 = vld [vmem:[#allocation10 + $0xc] sm:$0xf]
        %v1071 = vld [vmem:[#allocation10 + $0x10] sm:$0xf]
        %v1072 = vld [vmem:[#allocation10 + $0x14] sm:$0xf]
        %v1073 = vld [vmem:[#allocation10 + $0x18] sm:$0xf]
        %v1074 = vld [vmem:[#allocation10 + $0x1c] sm:$0xf]
        %v1075 = vld [vmem:[#allocation10 + $0x20] sm:$0xf]
        %v1076 = vld [vmem:[#allocation10 + $0x24] sm:$0xf]
        %v1077 = vld [vmem:[#allocation10 + $0x28] sm:$0xf]
        %v1078 = vld [vmem:[#allocation10 + $0x2c] sm:$0xf]
        %v1079 = vld [vmem:[#allocation10 + $0x30] sm:$0xf]
        %v1080 = vld [vmem:[#allocation10 + $0x34] sm:$0xf]
        %v1081 = vld [vmem:[#allocation10 + $0x38] sm:$0xf]
        %v1082 = vld [vmem:[#allocation10 + $0x3c] sm:$0xf]
        %v1099 = vunpack.c.l.b16 %v795
        %v1100 = vunpack.c.l.b16 %v796
        %v1101 = vunpack.c.l.b16 %v797
        %v1102 = vunpack.c.l.b16 %v798
        %v1103 = vunpack.c.l.b16 %v799
        %v1104 = vunpack.c.l.b16 %v800
        %v1105 = vunpack.c.l.b16 %v801
        %v1106 = vunpack.c.l.b16 %v802
        %v1107 = vunpack.c.l.b16 %v803
        %v1108 = vunpack.c.l.b16 %v804
        %v1109 = vunpack.c.l.b16 %v805
        %v1110 = vunpack.c.l.b16 %v806
        %v1111 = vunpack.c.l.b16 %v807
        %v1112 = vunpack.c.l.b16 %v808
        %v1113 = vunpack.c.l.b16 %v809
        %v1114 = vunpack.c.l.b16 %v810
        %v1115 = vpack.c.b16 %v1100, %v1099
        %v1116 = vpack.c.b16 %v1102, %v1101
        %v1117 = vpack.c.b16 %v1104, %v1103
        %v1118 = vpack.c.b16 %v1106, %v1105
        %v1119 = vpack.c.b16 %v1108, %v1107
        %v1120 = vpack.c.b16 %v1110, %v1109
        %v1121 = vpack.c.b16 %v1112, %v1111
        %v1122 = vpack.c.b16 %v1114, %v1113
        %v1147 = vunpack.c.l.b16 %v1067
        %v1148 = vunpack.c.l.b16 %v1068
        %v1149 = vunpack.c.l.b16 %v1069
        %v1150 = vunpack.c.l.b16 %v1070
        %v1151 = vunpack.c.l.b16 %v1071
        %v1152 = vunpack.c.l.b16 %v1072
        %v1153 = vunpack.c.l.b16 %v1073
        %v1154 = vunpack.c.l.b16 %v1074
        %v1155 = vunpack.c.l.b16 %v1075
        %v1156 = vunpack.c.l.b16 %v1076
        %v1157 = vunpack.c.l.b16 %v1077
        %v1158 = vunpack.c.l.b16 %v1078
        %v1159 = vunpack.c.l.b16 %v1079
        %v1160 = vunpack.c.l.b16 %v1080
        %v1161 = vunpack.c.l.b16 %v1081
        %v1162 = vunpack.c.l.b16 %v1082
        %v1163 = vpack.c.b16 %v1148, %v1147
        %v1164 = vpack.c.b16 %v1150, %v1149
        %v1165 = vpack.c.b16 %v1152, %v1151
        %v1166 = vpack.c.b16 %v1154, %v1153
        %v1167 = vpack.c.b16 %v1156, %v1155
        %v1168 = vpack.c.b16 %v1158, %v1157
        %v1169 = vpack.c.b16 %v1160, %v1159
        %v1170 = vpack.c.b16 %v1162, %v1161
        %1179 = vmatpush.bf16.msra.mxu0 %v1170
        %1180 = vmatpush.bf16.msra.mxu0 %v1169
        %1181 = vmatpush.bf16.msra.mxu0 %v1168
        %1182 = vmatpush.bf16.msra.mxu0 %v1167
        %1183 = vmatpush.bf16.msra.mxu0 %v1166
        %1184 = vmatpush.bf16.msra.mxu0 %v1165
        %1185 = vmatpush.bf16.msra.mxu0 %v1164
        %1186 = vmatpush.bf16.msra.mxu0 %v1163
        %1187 = vmatmul.bf16.gmra.mxu0 %v1115
        %v1188 = vpop.f32.mrf.mxu0
        %v1189 = vadd.f32 0.0, %v1188
        %v1190 = vpop.f32.mrf.mxu0
        %v1191 = vadd.f32 0.0, %v1190
        %1192 = vmatmul.bf16.gmra.mxu0 %v1116
        %v1193 = vpop.f32.mrf.mxu0
        %v1194 = vadd.f32 0.0, %v1193
        %v1195 = vpop.f32.mrf.mxu0
        %v1196 = vadd.f32 0.0, %v1195
        %1197 = vmatmul.bf16.gmra.mxu0 %v1117
        %v1198 = vpop.f32.mrf.mxu0
        %v1199 = vadd.f32 0.0, %v1198
        %v1200 = vpop.f32.mrf.mxu0
        %v1201 = vadd.f32 0.0, %v1200
        %1202 = vmatmul.bf16.gmra.mxu0 %v1118
        %v1203 = vpop.f32.mrf.mxu0
        %v1204 = vadd.f32 0.0, %v1203
        %v1205 = vpop.f32.mrf.mxu0
        %v1206 = vadd.f32 0.0, %v1205
        %1207 = vmatmul.bf16.gmra.mxu0 %v1119
        %v1208 = vpop.f32.mrf.mxu0
        %v1209 = vadd.f32 0.0, %v1208
        %v1210 = vpop.f32.mrf.mxu0
        %v1211 = vadd.f32 0.0, %v1210
        %1212 = vmatmul.bf16.gmra.mxu0 %v1120
        %v1213 = vpop.f32.mrf.mxu0
        %v1214 = vadd.f32 0.0, %v1213
        %v1215 = vpop.f32.mrf.mxu0
        %v1216 = vadd.f32 0.0, %v1215
        %1217 = vmatmul.bf16.gmra.mxu0 %v1121
        %v1218 = vpop.f32.mrf.mxu0
        %v1219 = vadd.f32 0.0, %v1218
        %v1220 = vpop.f32.mrf.mxu0
        %v1221 = vadd.f32 0.0, %v1220
        %1222 = vmatmul.bf16.gmra.mxu0 %v1122
        %v1223 = vpop.f32.mrf.mxu0
        %v1224 = vadd.f32 0.0, %v1223
        %v1225 = vpop.f32.mrf.mxu0
        %v1226 = vadd.f32 0.0, %v1225
        %1227 = vdwg.mxu0
        %v1229 = vrot.slane %v1014, 1
        %v1230 = vrot.slane %v1014, 2
        %v1231 = vrot.slane %v1014, 3
        %v1232 = vrot.slane %v1014, 4
        %v1233 = vrot.slane %v1014, 5
        %v1234 = vrot.slane %v1014, 6
        %v1235 = vrot.slane %v1014, 7
        %v1236 = vperm.slane %v1014, 0
        %v1237 = vperm.slane %v1229, 0
        %v1238 = vperm.slane %v1230, 0
        %v1239 = vperm.slane %v1231, 0
        %v1240 = vperm.slane %v1232, 0
        %v1241 = vperm.slane %v1233, 0
        %v1242 = vperm.slane %v1234, 0
        %v1243 = vperm.slane %v1235, 0
        %v1252 = vadd.f32 %v1189, %v1236
        %v1253 = vadd.f32 %v1191, %v1236
        %v1254 = vadd.f32 %v1194, %v1237
        %v1255 = vadd.f32 %v1196, %v1237
        %v1256 = vadd.f32 %v1199, %v1238
        %v1257 = vadd.f32 %v1201, %v1238
        %v1258 = vadd.f32 %v1204, %v1239
        %v1259 = vadd.f32 %v1206, %v1239
        %v1260 = vadd.f32 %v1209, %v1240
        %v1261 = vadd.f32 %v1211, %v1240
        %v1262 = vadd.f32 %v1214, %v1241
        %v1263 = vadd.f32 %v1216, %v1241
        %v1264 = vadd.f32 %v1219, %v1242
        %v1265 = vadd.f32 %v1221, %v1242
        %v1266 = vadd.f32 %v1224, %v1243
        %v1267 = vadd.f32 %v1226, %v1243
        %v1268 = vld [vmem:[#allocation11] sm:$0x1]
        %v1270 = vperm.slane %v1268, 0
        %v1272 = vadd.f32 %v1252, %v1270
        %v1273 = vadd.f32 %v1253, %v1270
        %v1274 = vadd.f32 %v1254, %v1270
        %v1275 = vadd.f32 %v1255, %v1270
        %v1276 = vadd.f32 %v1256, %v1270
        %v1277 = vadd.f32 %v1257, %v1270
        %v1278 = vadd.f32 %v1258, %v1270
        %v1279 = vadd.f32 %v1259, %v1270
        %v1280 = vadd.f32 %v1260, %v1270
        %v1281 = vadd.f32 %v1261, %v1270
        %v1282 = vadd.f32 %v1262, %v1270
        %v1283 = vadd.f32 %v1263, %v1270
        %v1284 = vadd.f32 %v1264, %v1270
        %v1285 = vadd.f32 %v1265, %v1270
        %v1286 = vadd.f32 %v1266, %v1270
        %v1287 = vadd.f32 %v1267, %v1270
        %v1288 = vtanh.pop %v1272
        %v1289 = vtanh.pop %v1273
        %v1290 = vtanh.pop %v1274
        %v1291 = vtanh.pop %v1275
        %v1292 = vtanh.pop %v1276
        %v1293 = vtanh.pop %v1277
        %v1294 = vtanh.pop %v1278
        %v1295 = vtanh.pop %v1279
        %v1296 = vtanh.pop %v1280
        %v1297 = vtanh.pop %v1281
        %v1298 = vtanh.pop %v1282
        %v1299 = vtanh.pop %v1283
        %v1300 = vtanh.pop %v1284
        %v1301 = vtanh.pop %v1285
        %v1302 = vtanh.pop %v1286
        %v1303 = vtanh.pop %v1287
        %v1304 = vld [vmem:[%s6] sm:$0x1]
        %v1306 = vperm.slane %v1304, 0
        %v1308 = vmul.f32 %v1288, %v1306
        %v1309 = vmul.f32 %v1289, %v1306
        %v1310 = vmul.f32 %v1290, %v1306
        %v1311 = vmul.f32 %v1291, %v1306
        %v1312 = vmul.f32 %v1292, %v1306
        %v1313 = vmul.f32 %v1293, %v1306
        %v1314 = vmul.f32 %v1294, %v1306
        %v1315 = vmul.f32 %v1295, %v1306
        %v1316 = vmul.f32 %v1296, %v1306
        %v1317 = vmul.f32 %v1297, %v1306
        %v1318 = vmul.f32 %v1298, %v1306
        %v1319 = vmul.f32 %v1299, %v1306
        %v1320 = vmul.f32 %v1300, %v1306
        %v1321 = vmul.f32 %v1301, %v1306
        %v1322 = vmul.f32 %v1302, %v1306
        %v1323 = vmul.f32 %v1303, %v1306
        %1324 = vadd.xlane.f32.xlu0 %v1308
        %v1325 = vpop.xlane.xlu0 %1324
        %1326 = vadd.xlane.f32.xlu0 %v1309
        %v1327 = vpop.xlane.xlu0 %1326
        %1328 = vadd.xlane.f32.xlu0 %v1310
        %v1329 = vpop.xlane.xlu0 %1328
        %1330 = vadd.xlane.f32.xlu0 %v1311
        %v1331 = vpop.xlane.xlu0 %1330
        %1332 = vadd.xlane.f32.xlu0 %v1312
        %v1333 = vpop.xlane.xlu0 %1332
        %1334 = vadd.xlane.f32.xlu0 %v1313
        %v1335 = vpop.xlane.xlu0 %1334
        %1336 = vadd.xlane.f32.xlu0 %v1314
        %v1337 = vpop.xlane.xlu0 %1336
        %1338 = vadd.xlane.f32.xlu0 %v1315
        %v1339 = vpop.xlane.xlu0 %1338
        %1340 = vadd.xlane.f32.xlu0 %v1316
        %v1341 = vpop.xlane.xlu0 %1340
        %1342 = vadd.xlane.f32.xlu0 %v1317
        %v1343 = vpop.xlane.xlu0 %1342
        %1344 = vadd.xlane.f32.xlu0 %v1318
        %v1345 = vpop.xlane.xlu0 %1344
        %1346 = vadd.xlane.f32.xlu0 %v1319
        %v1347 = vpop.xlane.xlu0 %1346
        %1348 = vadd.xlane.f32.xlu0 %v1320
        %v1349 = vpop.xlane.xlu0 %1348
        %1350 = vadd.xlane.f32.xlu0 %v1321
        %v1351 = vpop.xlane.xlu0 %1350
        %1352 = vadd.xlane.f32.xlu0 %v1322
        %v1353 = vpop.xlane.xlu0 %1352
        %1354 = vadd.xlane.f32.xlu0 %v1323
        %v1355 = vpop.xlane.xlu0 %1354
        %v1356 = vlaneseq
        %v1357 = vand.u32 %v1356, 127
        %vm1358 = vcmp.lt.s32.totalorder %v1357, 8
        %v1375 = vperm.slane %v1325, %v1357
        %v1376 = vadd.s32 %v1357, 4294967288
        %v1377 = vperm.slane %v1327, %v1376
        %vm1378 = vcmask 130112
        %v1379 = vsel %vm1378, %v1377, %v1375
        %v1380 = vperm.slane %v1329, %v1357
        %v1381 = vperm.slane %v1331, %v1376
        %v1382 = vsel %vm1378, %v1381, %v1380
        %v1383 = vperm.slane %v1333, %v1357
        %v1384 = vperm.slane %v1335, %v1376
        %v1385 = vsel %vm1378, %v1384, %v1383
        %v1386 = vperm.slane %v1337, %v1357
        %v1387 = vperm.slane %v1339, %v1376
        %v1388 = vsel %vm1378, %v1387, %v1386
        %v1389 = vperm.slane %v1341, %v1357
        %v1390 = vperm.slane %v1343, %v1376
        %v1391 = vsel %vm1378, %v1390, %v1389
        %v1392 = vperm.slane %v1345, %v1357
        %v1393 = vperm.slane %v1347, %v1376
        %v1394 = vsel %vm1378, %v1393, %v1392
        %v1395 = vperm.slane %v1349, %v1357
        %v1396 = vperm.slane %v1351, %v1376
        %v1397 = vsel %vm1378, %v1396, %v1395
        %v1398 = vperm.slane %v1353, %v1357
        %v1399 = vperm.slane %v1355, %v1376
        %v1400 = vsel %vm1378, %v1399, %v1398
        %vm1401 = vcmask 1041409
        %v1402 = vsel %vm1401, %v1382, %v1379
        %vm1403 = vcmask 1042434
        %v1404 = vsel %vm1403, %v1385, %v1402
        %vm1405 = vcmask 1043459
        %v1406 = vsel %vm1405, %v1388, %v1404
        %vm1407 = vcmask 1044484
        %v1408 = vsel %vm1407, %v1391, %v1406
        %vm1409 = vcmask 1045509
        %v1410 = vsel %vm1409, %v1394, %v1408
        %vm1411 = vcmask 1046534
        %v1412 = vsel %vm1411, %v1397, %v1410
        %vm1413 = vcmask 1047559
        %v1414 = vsel %vm1413, %v1400, %v1412
        %v1416 = vsel %vm1358, %v1414, -1e+30
        %vm1417 = vcmask 130048
        %v1418 = vsel %vm1417, %v1416, -inf
        %1419 = vmax.xlane.f32.xlu0 %v1418
        %v1420 = vpop.xlane.xlu0 %1419
        %v1421 = vsub.f32 %v1416, %v1420
        %v1422 = vmul.f32 %v1421, 1.442695
        %v1423 = vpow.pop %v1422
        %v1424 = vsel %vm1417, %v1423, 0.0
        %1425 = vadd.xlane.f32.xlu0 %v1424
        %v1426 = vpop.xlane.xlu0 %1425
        %v1427 = vrcp.pop %v1426
        %v1428 = vmul.f32 %v1423, %v1427
        %v1429 = vunpack.c.l.bf16 %v795
        %v1430 = vunpack.c.l.bf16 %v796
        %v1431 = vunpack.c.l.bf16 %v797
        %v1432 = vunpack.c.l.bf16 %v798
        %v1433 = vunpack.c.l.bf16 %v799
        %v1434 = vunpack.c.l.bf16 %v800
        %v1435 = vunpack.c.l.bf16 %v801
        %v1436 = vunpack.c.l.bf16 %v802
        %v1437 = vunpack.c.l.bf16 %v803
        %v1438 = vunpack.c.l.bf16 %v804
        %v1439 = vunpack.c.l.bf16 %v805
        %v1440 = vunpack.c.l.bf16 %v806
        %v1441 = vunpack.c.l.bf16 %v807
        %v1442 = vunpack.c.l.bf16 %v808
        %v1443 = vunpack.c.l.bf16 %v809
        %v1444 = vunpack.c.l.bf16 %v810
        %v1445 = vperm.slane %v1428, 0
        %v1446 = vlaneseq
        %v1447 = vshrl.u32 %v1446, 7
        %1449 = vset.pattern.permute.xlu0 %v1447
        %1450 = vperm.xlu0 %1449, %v1445
        %v1451 = vpop.permute.xlu0 %1450
        %v1452 = vlaneseq
        %v1453 = vshrl.u32 %v1452, 7
        %v1454 = vadd.s32 %v1453, 8
        %1455 = vset.pattern.permute.xlu0 %v1454
        %1456 = vperm.xlu0 %1455, %v1445
        %v1457 = vpop.permute.xlu0 %1456
        %v1458 = vperm.slane %v1428, 1
        %v1459 = vlaneseq
        %v1460 = vshrl.u32 %v1459, 7
        %1462 = vset.pattern.permute.xlu0 %v1460
        %1463 = vperm.xlu0 %1462, %v1458
        %v1464 = vpop.permute.xlu0 %1463
        %v1465 = vlaneseq
        %v1466 = vshrl.u32 %v1465, 7
        %v1467 = vadd.s32 %v1466, 8
        %1468 = vset.pattern.permute.xlu0 %v1467
        %1469 = vperm.xlu0 %1468, %v1458
        %v1470 = vpop.permute.xlu0 %1469
        %v1471 = vperm.slane %v1428, 2
        %v1472 = vlaneseq
        %v1473 = vshrl.u32 %v1472, 7
        %1475 = vset.pattern.permute.xlu0 %v1473
        %1476 = vperm.xlu0 %1475, %v1471
        %v1477 = vpop.permute.xlu0 %1476
        %v1478 = vlaneseq
        %v1479 = vshrl.u32 %v1478, 7
        %v1480 = vadd.s32 %v1479, 8
        %1481 = vset.pattern.permute.xlu0 %v1480
        %1482 = vperm.xlu0 %1481, %v1471
        %v1483 = vpop.permute.xlu0 %1482
        %v1484 = vperm.slane %v1428, 3
        %v1485 = vlaneseq
        %v1486 = vshrl.u32 %v1485, 7
        %1488 = vset.pattern.permute.xlu0 %v1486
        %1489 = vperm.xlu0 %1488, %v1484
        %v1490 = vpop.permute.xlu0 %1489
        %v1491 = vlaneseq
        %v1492 = vshrl.u32 %v1491, 7
        %v1493 = vadd.s32 %v1492, 8
        %1494 = vset.pattern.permute.xlu0 %v1493
        %1495 = vperm.xlu0 %1494, %v1484
        %v1496 = vpop.permute.xlu0 %1495
        %v1497 = vperm.slane %v1428, 4
        %v1498 = vlaneseq
        %v1499 = vshrl.u32 %v1498, 7
        %1501 = vset.pattern.permute.xlu0 %v1499
        %1502 = vperm.xlu0 %1501, %v1497
        %v1503 = vpop.permute.xlu0 %1502
        %v1504 = vlaneseq
        %v1505 = vshrl.u32 %v1504, 7
        %v1506 = vadd.s32 %v1505, 8
        %1507 = vset.pattern.permute.xlu0 %v1506
        %1508 = vperm.xlu0 %1507, %v1497
        %v1509 = vpop.permute.xlu0 %1508
        %v1510 = vperm.slane %v1428, 5
        %v1511 = vlaneseq
        %v1512 = vshrl.u32 %v1511, 7
        %1514 = vset.pattern.permute.xlu0 %v1512
        %1515 = vperm.xlu0 %1514, %v1510
        %v1516 = vpop.permute.xlu0 %1515
        %v1517 = vlaneseq
        %v1518 = vshrl.u32 %v1517, 7
        %v1519 = vadd.s32 %v1518, 8
        %1520 = vset.pattern.permute.xlu0 %v1519
        %1521 = vperm.xlu0 %1520, %v1510
        %v1522 = vpop.permute.xlu0 %1521
        %v1523 = vperm.slane %v1428, 6
        %v1524 = vlaneseq
        %v1525 = vshrl.u32 %v1524, 7
        %1527 = vset.pattern.permute.xlu0 %v1525
        %1528 = vperm.xlu0 %1527, %v1523
        %v1529 = vpop.permute.xlu0 %1528
        %v1530 = vlaneseq
        %v1531 = vshrl.u32 %v1530, 7
        %v1532 = vadd.s32 %v1531, 8
        %1533 = vset.pattern.permute.xlu0 %v1532
        %1534 = vperm.xlu0 %1533, %v1523
        %v1535 = vpop.permute.xlu0 %1534
        %v1536 = vperm.slane %v1428, 7
        %v1537 = vlaneseq
        %v1538 = vshrl.u32 %v1537, 7
        %1540 = vset.pattern.permute.xlu0 %v1538
        %1541 = vperm.xlu0 %1540, %v1536
        %v1542 = vpop.permute.xlu0 %1541
        %v1543 = vlaneseq
        %v1544 = vshrl.u32 %v1543, 7
        %v1545 = vadd.s32 %v1544, 8
        %1546 = vset.pattern.permute.xlu0 %v1545
        %1547 = vperm.xlu0 %1546, %v1536
        %v1548 = vpop.permute.xlu0 %1547
        %v1549 = vmul.f32 %v1429, %v1451
        %v1550 = vmul.f32 %v1430, %v1457
        %v1551 = vmul.f32 %v1431, %v1464
        %v1552 = vmul.f32 %v1432, %v1470
        %v1553 = vmul.f32 %v1433, %v1477
        %v1554 = vmul.f32 %v1434, %v1483
        %v1555 = vmul.f32 %v1435, %v1490
        %v1556 = vmul.f32 %v1436, %v1496
        %v1557 = vmul.f32 %v1437, %v1503
        %v1558 = vmul.f32 %v1438, %v1509
        %v1559 = vmul.f32 %v1439, %v1516
        %v1560 = vmul.f32 %v1440, %v1522
        %v1561 = vmul.f32 %v1441, %v1529
        %v1562 = vmul.f32 %v1442, %v1535
        %v1563 = vmul.f32 %v1443, %v1542
        %v1564 = vmul.f32 %v1444, %v1548
        %v1565 = vadd.f32 %v1549, %v1550
        %v1566 = vrot.slane %v1565, 4
        %v1567 = vadd.f32 %v1565, %v1566
        %v1568 = vrot.slane %v1567, 2
        %v1569 = vadd.f32 %v1567, %v1568
        %v1570 = vrot.slane %v1569, 1
        %v1571 = vadd.f32 %v1569, %v1570
        %v1572 = vadd.f32 %v1551, %v1552
        %v1573 = vrot.slane %v1572, 4
        %v1574 = vadd.f32 %v1572, %v1573
        %v1575 = vrot.slane %v1574, 2
        %v1576 = vadd.f32 %v1574, %v1575
        %v1577 = vrot.slane %v1576, 1
        %v1578 = vadd.f32 %v1576, %v1577
        %v1579 = vadd.f32 %v1553, %v1554
        %v1580 = vrot.slane %v1579, 4
        %v1581 = vadd.f32 %v1579, %v1580
        %v1582 = vrot.slane %v1581, 2
        %v1583 = vadd.f32 %v1581, %v1582
        %v1584 = vrot.slane %v1583, 1
        %v1585 = vadd.f32 %v1583, %v1584
        %v1586 = vadd.f32 %v1555, %v1556
        %v1587 = vrot.slane %v1586, 4
        %v1588 = vadd.f32 %v1586, %v1587
        %v1589 = vrot.slane %v1588, 2
        %v1590 = vadd.f32 %v1588, %v1589
        %v1591 = vrot.slane %v1590, 1
        %v1592 = vadd.f32 %v1590, %v1591
        %v1593 = vadd.f32 %v1557, %v1558
        %v1594 = vrot.slane %v1593, 4
        %v1595 = vadd.f32 %v1593, %v1594
        %v1596 = vrot.slane %v1595, 2
        %v1597 = vadd.f32 %v1595, %v1596
        %v1598 = vrot.slane %v1597, 1
        %v1599 = vadd.f32 %v1597, %v1598
        %v1600 = vadd.f32 %v1559, %v1560
        %v1601 = vrot.slane %v1600, 4
        %v1602 = vadd.f32 %v1600, %v1601
        %v1603 = vrot.slane %v1602, 2
        %v1604 = vadd.f32 %v1602, %v1603
        %v1605 = vrot.slane %v1604, 1
        %v1606 = vadd.f32 %v1604, %v1605
        %v1607 = vadd.f32 %v1561, %v1562
        %v1608 = vrot.slane %v1607, 4
        %v1609 = vadd.f32 %v1607, %v1608
        %v1610 = vrot.slane %v1609, 2
        %v1611 = vadd.f32 %v1609, %v1610
        %v1612 = vrot.slane %v1611, 1
        %v1613 = vadd.f32 %v1611, %v1612
        %v1614 = vadd.f32 %v1563, %v1564
        %v1615 = vrot.slane %v1614, 4
        %v1616 = vadd.f32 %v1614, %v1615
        %v1617 = vrot.slane %v1616, 2
        %v1618 = vadd.f32 %v1616, %v1617
        %v1619 = vrot.slane %v1618, 1
        %v1620 = vadd.f32 %v1618, %v1619
        %v1621 = vld [vmem:[%s670] sm:$0xf]
        %v1622 = vld [vmem:[#allocation8] sm:$0xff]
        %v1623 = vld [vmem:[#allocation8 + $0x8] sm:$0xf]
        %v1624 = vld [vmem:[#allocation8 + $0xc] sm:$0xff]
        %v1625 = vld [vmem:[#allocation8 + $0x14] sm:$0xf]
        %v1626 = vld [vmem:[#allocation8 + $0x18] sm:$0xff]
        %v1627 = vld [vmem:[#allocation8 + $0x20] sm:$0xf]
        %v1628 = vld [vmem:[#allocation8 + $0x24] sm:$0xff]
        %v1629 = vld [vmem:[#allocation8 + $0x2c] sm:$0xf]
        %v1630 = vld [vmem:[#allocation8 + $0x30] sm:$0xff]
        %v1631 = vld [vmem:[#allocation8 + $0x38] sm:$0xf]
        %v1632 = vld [vmem:[#allocation8 + $0x3c] sm:$0xff]
        %v1633 = vld [vmem:[#allocation8 + $0x44] sm:$0xf]
        %v1634 = vld [vmem:[#allocation8 + $0x48] sm:$0xff]
        %v1635 = vld [vmem:[#allocation8 + $0x50] sm:$0xf]
        %v1636 = vld [vmem:[#allocation8 + $0x54] sm:$0xff]
        %v1637 = vld [vmem:[#allocation8 + $0x5c] sm:$0xf]
        %v1638 = vld [vmem:[#allocation8 + $0x60] sm:$0xff]
        %v1639 = vld [vmem:[#allocation8 + $0x68] sm:$0xf]
        %v1640 = vld [vmem:[#allocation8 + $0x6c] sm:$0xff]
        %v1641 = vld [vmem:[#allocation8 + $0x74] sm:$0xf]
        %v1642 = vld [vmem:[#allocation8 + $0x78] sm:$0xff]
        %v1643 = vld [vmem:[#allocation8 + $0x80] sm:$0xf]
        %v1644 = vld [vmem:[#allocation8 + $0x84] sm:$0xff]
        %v1645 = vld [vmem:[#allocation8 + $0x8c] sm:$0xf]
        %v1646 = vld [vmem:[#allocation8 + $0x90] sm:$0xff]
        %v1647 = vld [vmem:[#allocation8 + $0x98] sm:$0xf]
        %v1648 = vld [vmem:[#allocation8 + $0x9c] sm:$0xff]
        %v1649 = vld [vmem:[#allocation8 + $0xa4] sm:$0xf]
        %v1650 = vld [vmem:[#allocation8 + $0xa8] sm:$0xff]
        %v1651 = vld [vmem:[#allocation8 + $0xb0] sm:$0xf]
        %v1652 = vld [vmem:[#allocation8 + $0xb4] sm:$0xff]
        %v1653 = vld [vmem:[#allocation8 + $0xbc] sm:$0xf]
        %v1654 = vpack.c.bf16 %v1571, %v1571
        %v1655 = vpack.c.bf16 %v1578, %v1578
        %v1656 = vpack.c.bf16 %v1585, %v1585
        %v1657 = vpack.c.bf16 %v1592, %v1592
        %v1658 = vpack.c.bf16 %v1599, %v1599
        %v1659 = vpack.c.bf16 %v1606, %v1606
        %v1660 = vpack.c.bf16 %v1613, %v1613
        %v1661 = vpack.c.bf16 %v1620, %v1620
        %v1662 = vld [vmem:[#allocation14] sm:$0xff]
        %v1663 = vld [vmem:[#allocation14 + $0x8] sm:$0xf]
        %v1664 = vld [vmem:[#allocation14 + $0xc] sm:$0xff]
        %v1665 = vld [vmem:[#allocation14 + $0x14] sm:$0xf]
        %v1666 = vld [vmem:[#allocation14 + $0x18] sm:$0xff]
        %v1667 = vld [vmem:[#allocation14 + $0x20] sm:$0xf]
        %v1668 = vld [vmem:[#allocation14 + $0x24] sm:$0xff]
        %v1669 = vld [vmem:[#allocation14 + $0x2c] sm:$0xf]
        %v1670 = vld [vmem:[#allocation14 + $0x30] sm:$0xff]
        %v1671 = vld [vmem:[#allocation14 + $0x38] sm:$0xf]
        %v1672 = vld [vmem:[#allocation14 + $0x3c] sm:$0xff]
        %v1673 = vld [vmem:[#allocation14 + $0x44] sm:$0xf]
        %v1674 = vld [vmem:[#allocation14 + $0x48] sm:$0xff]
        %v1675 = vld [vmem:[#allocation14 + $0x50] sm:$0xf]
        %v1676 = vld [vmem:[#allocation14 + $0x54] sm:$0xff]
        %v1677 = vld [vmem:[#allocation14 + $0x5c] sm:$0xf]
        %v1678 = vld [vmem:[#allocation14 + $0x60] sm:$0xff]
        %v1679 = vld [vmem:[#allocation14 + $0x68] sm:$0xf]
        %v1680 = vld [vmem:[#allocation14 + $0x6c] sm:$0xff]
        %v1681 = vld [vmem:[#allocation14 + $0x74] sm:$0xf]
        %v1682 = vld [vmem:[#allocation14 + $0x78] sm:$0xff]
        %v1683 = vld [vmem:[#allocation14 + $0x80] sm:$0xf]
        %v1684 = vld [vmem:[#allocation14 + $0x84] sm:$0xff]
        %v1685 = vld [vmem:[#allocation14 + $0x8c] sm:$0xf]
        %v1686 = vld [vmem:[#allocation14 + $0x90] sm:$0xff]
        %v1687 = vld [vmem:[#allocation14 + $0x98] sm:$0xf]
        %v1688 = vld [vmem:[#allocation14 + $0x9c] sm:$0xff]
        %v1689 = vld [vmem:[#allocation14 + $0xa4] sm:$0xf]
        %v1690 = vld [vmem:[#allocation14 + $0xa8] sm:$0xff]
        %v1691 = vld [vmem:[#allocation14 + $0xb0] sm:$0xf]
        %v1692 = vld [vmem:[#allocation14 + $0xb4] sm:$0xff]
        %v1693 = vld [vmem:[#allocation14 + $0xbc] sm:$0xf]
        %v1702 = vunpack.c.l.b16 %v1654
        %v1703 = vunpack.c.l.b16 %v1655
        %v1704 = vunpack.c.l.b16 %v1656
        %v1705 = vunpack.c.l.b16 %v1657
        %v1706 = vunpack.c.l.b16 %v1658
        %v1707 = vunpack.c.l.b16 %v1659
        %v1708 = vunpack.c.l.b16 %v1660
        %v1709 = vunpack.c.l.b16 %v1661
        %v1710 = vsel %vm1401, %v1703, %v1702
        %v1711 = vsel %vm1403, %v1704, %v1710
        %v1712 = vsel %vm1405, %v1705, %v1711
        %v1713 = vsel %vm1407, %v1706, %v1712
        %v1714 = vsel %vm1409, %v1707, %v1713
        %v1715 = vsel %vm1411, %v1708, %v1714
        %v1716 = vsel %vm1413, %v1709, %v1715
        %v1717 = vpack.c.b16 %v1716, %v1716
        %v1751 = vunpack.c.l.b16 %v1662
        %v1752 = vunpack.c.h.b16 %v1662
        %v1753 = vunpack.c.l.b16 %v1663
        %v1754 = vunpack.c.l.b16 %v1664
        %v1755 = vunpack.c.h.b16 %v1664
        %v1756 = vunpack.c.l.b16 %v1665
        %v1757 = vunpack.c.l.b16 %v1666
        %v1758 = vunpack.c.h.b16 %v1666
        %v1759 = vunpack.c.l.b16 %v1667
        %v1760 = vunpack.c.l.b16 %v1668
        %v1761 = vunpack.c.h.b16 %v1668
        %v1762 = vunpack.c.l.b16 %v1669
        %v1763 = vunpack.c.l.b16 %v1670
        %v1764 = vunpack.c.h.b16 %v1670
        %v1765 = vunpack.c.l.b16 %v1671
        %v1766 = vunpack.c.l.b16 %v1672
        %v1767 = vunpack.c.h.b16 %v1672
        %v1768 = vunpack.c.l.b16 %v1673
        %v1769 = vunpack.c.l.b16 %v1674
        %v1770 = vunpack.c.h.b16 %v1674
        %v1771 = vunpack.c.l.b16 %v1675
        %v1772 = vunpack.c.l.b16 %v1676
        %v1773 = vunpack.c.h.b16 %v1676
        %v1774 = vunpack.c.l.b16 %v1677
        %v1775 = vunpack.c.l.b16 %v1678
        %v1776 = vunpack.c.h.b16 %v1678
        %v1777 = vunpack.c.l.b16 %v1679
        %v1778 = vunpack.c.l.b16 %v1680
        %v1779 = vunpack.c.h.b16 %v1680
        %v1780 = vunpack.c.l.b16 %v1681
        %v1781 = vunpack.c.l.b16 %v1682
        %v1782 = vunpack.c.h.b16 %v1682
        %v1783 = vunpack.c.l.b16 %v1683
        %v1784 = vunpack.c.l.b16 %v1684
        %v1785 = vunpack.c.h.b16 %v1684
        %v1786 = vunpack.c.l.b16 %v1685
        %v1787 = vunpack.c.l.b16 %v1686
        %v1788 = vunpack.c.h.b16 %v1686
        %v1789 = vunpack.c.l.b16 %v1687
        %v1790 = vunpack.c.l.b16 %v1688
        %v1791 = vunpack.c.h.b16 %v1688
        %v1792 = vunpack.c.l.b16 %v1689
        %v1793 = vunpack.c.l.b16 %v1690
        %v1794 = vunpack.c.h.b16 %v1690
        %v1795 = vunpack.c.l.b16 %v1691
        %v1796 = vunpack.c.l.b16 %v1692
        %v1797 = vunpack.c.h.b16 %v1692
        %v1798 = vunpack.c.l.b16 %v1693
        %v1799 = vpack.c.b16 %v1754, %v1751
        %v1800 = vpack.c.b16 %v1755, %v1752
        %v1801 = vpack.c.b16 %v1756, %v1753
        %v1802 = vpack.c.b16 %v1760, %v1757
        %v1803 = vpack.c.b16 %v1761, %v1758
        %v1804 = vpack.c.b16 %v1762, %v1759
        %v1805 = vpack.c.b16 %v1766, %v1763
        %v1806 = vpack.c.b16 %v1767, %v1764
        %v1807 = vpack.c.b16 %v1768, %v1765
        %v1808 = vpack.c.b16 %v1772, %v1769
        %v1809 = vpack.c.b16 %v1773, %v1770
        %v1810 = vpack.c.b16 %v1774, %v1771
        %v1811 = vpack.c.b16 %v1778, %v1775
        %v1812 = vpack.c.b16 %v1779, %v1776
        %v1813 = vpack.c.b16 %v1780, %v1777
        %v1814 = vpack.c.b16 %v1784, %v1781
        %v1815 = vpack.c.b16 %v1785, %v1782
        %v1816 = vpack.c.b16 %v1786, %v1783
        %v1817 = vpack.c.b16 %v1790, %v1787
        %v1818 = vpack.c.b16 %v1791, %v1788
        %v1819 = vpack.c.b16 %v1792, %v1789
        %v1820 = vpack.c.b16 %v1796, %v1793
        %v1821 = vpack.c.b16 %v1797, %v1794
        %v1822 = vpack.c.b16 %v1798, %v1795
        %1847 = vmatpush.bf16.msra.mxu0 %v1820
        %1848 = vmatpush.bf16.msra.mxu0 %v1817
        %1849 = vmatpush.bf16.msra.mxu0 %v1814
        %1850 = vmatpush.bf16.msra.mxu0 %v1811
        %1851 = vmatpush.bf16.msra.mxu0 %v1808
        %1852 = vmatpush.bf16.msra.mxu0 %v1805
        %1853 = vmatpush.bf16.msra.mxu0 %v1802
        %1854 = vmatpush.bf16.msra.mxu0 %v1799
        %1855 = vmatmul.bf16.gmra.mxu0 %v1717
        %v1856 = vpop.f32.mrf.mxu0
        %v1857 = vadd.f32 0.0, %v1856
        %v1858 = vpop.f32.mrf.mxu0
        %1859 = vdwg.mxu0
        %1860 = vmatpush.bf16.msra.mxu0 %v1821
        %1861 = vmatpush.bf16.msra.mxu0 %v1818
        %1862 = vmatpush.bf16.msra.mxu0 %v1815
        %1863 = vmatpush.bf16.msra.mxu0 %v1812
        %1864 = vmatpush.bf16.msra.mxu0 %v1809
        %1865 = vmatpush.bf16.msra.mxu0 %v1806
        %1866 = vmatpush.bf16.msra.mxu0 %v1803
        %1867 = vmatpush.bf16.msra.mxu0 %v1800
        %1868 = vmatmul.bf16.gmra.mxu0 %v1717
        %v1869 = vpop.f32.mrf.mxu0
        %v1870 = vadd.f32 0.0, %v1869
        %v1871 = vpop.f32.mrf.mxu0
        %1872 = vdwg.mxu0
        %1873 = vmatpush.bf16.msra.mxu0 %v1822
        %1874 = vmatpush.bf16.msra.mxu0 %v1819
        %1875 = vmatpush.bf16.msra.mxu0 %v1816
        %1876 = vmatpush.bf16.msra.mxu0 %v1813
        %1877 = vmatpush.bf16.msra.mxu0 %v1810
        %1878 = vmatpush.bf16.msra.mxu0 %v1807
        %1879 = vmatpush.bf16.msra.mxu0 %v1804
        %1880 = vmatpush.bf16.msra.mxu0 %v1801
        %1881 = vmatmul.bf16.gmra.mxu0 %v1717
        %v1882 = vpop.f32.mrf.mxu0
        %v1883 = vadd.f32 0.0, %v1882
        %v1884 = vpop.f32.mrf.mxu0
        %1885 = vdwg.mxu0
        %v1918 = vunpack.c.l.b16 %v1622
        %v1919 = vunpack.c.h.b16 %v1622
        %v1920 = vunpack.c.l.b16 %v1623
        %v1921 = vunpack.c.l.b16 %v1624
        %v1922 = vunpack.c.h.b16 %v1624
        %v1923 = vunpack.c.l.b16 %v1625
        %v1924 = vunpack.c.l.b16 %v1626
        %v1925 = vunpack.c.h.b16 %v1626
        %v1926 = vunpack.c.l.b16 %v1627
        %v1927 = vunpack.c.l.b16 %v1628
        %v1928 = vunpack.c.h.b16 %v1628
        %v1929 = vunpack.c.l.b16 %v1629
        %v1930 = vunpack.c.l.b16 %v1630
        %v1931 = vunpack.c.h.b16 %v1630
        %v1932 = vunpack.c.l.b16 %v1631
        %v1933 = vunpack.c.l.b16 %v1632
        %v1934 = vunpack.c.h.b16 %v1632
        %v1935 = vunpack.c.l.b16 %v1633
        %v1936 = vunpack.c.l.b16 %v1634
        %v1937 = vunpack.c.h.b16 %v1634
        %v1938 = vunpack.c.l.b16 %v1635
        %v1939 = vunpack.c.l.b16 %v1636
        %v1940 = vunpack.c.h.b16 %v1636
        %v1941 = vunpack.c.l.b16 %v1637
        %v1942 = vunpack.c.l.b16 %v1638
        %v1943 = vunpack.c.h.b16 %v1638
        %v1944 = vunpack.c.l.b16 %v1639
        %v1945 = vunpack.c.l.b16 %v1640
        %v1946 = vunpack.c.h.b16 %v1640
        %v1947 = vunpack.c.l.b16 %v1641
        %v1948 = vunpack.c.l.b16 %v1642
        %v1949 = vunpack.c.h.b16 %v1642
        %v1950 = vunpack.c.l.b16 %v1643
        %v1951 = vunpack.c.l.b16 %v1644
        %v1952 = vunpack.c.h.b16 %v1644
        %v1953 = vunpack.c.l.b16 %v1645
        %v1954 = vunpack.c.l.b16 %v1646
        %v1955 = vunpack.c.h.b16 %v1646
        %v1956 = vunpack.c.l.b16 %v1647
        %v1957 = vunpack.c.l.b16 %v1648
        %v1958 = vunpack.c.h.b16 %v1648
        %v1959 = vunpack.c.l.b16 %v1649
        %v1960 = vunpack.c.l.b16 %v1650
        %v1961 = vunpack.c.h.b16 %v1650
        %v1962 = vunpack.c.l.b16 %v1651
        %v1963 = vunpack.c.l.b16 %v1652
        %v1964 = vunpack.c.h.b16 %v1652
        %v1965 = vunpack.c.l.b16 %v1653
        %v1966 = vpack.c.b16 %v1921, %v1918
        %v1967 = vpack.c.b16 %v1922, %v1919
        %v1968 = vpack.c.b16 %v1923, %v1920
        %v1969 = vpack.c.b16 %v1927, %v1924
        %v1970 = vpack.c.b16 %v1928, %v1925
        %v1971 = vpack.c.b16 %v1929, %v1926
        %v1972 = vpack.c.b16 %v1933, %v1930
        %v1973 = vpack.c.b16 %v1934, %v1931
        %v1974 = vpack.c.b16 %v1935, %v1932
        %v1975 = vpack.c.b16 %v1939, %v1936
        %v1976 = vpack.c.b16 %v1940, %v1937
        %v1977 = vpack.c.b16 %v1941, %v1938
        %v1978 = vpack.c.b16 %v1945, %v1942
        %v1979 = vpack.c.b16 %v1946, %v1943
        %v1980 = vpack.c.b16 %v1947, %v1944
        %v1981 = vpack.c.b16 %v1951, %v1948
        %v1982 = vpack.c.b16 %v1952, %v1949
        %v1983 = vpack.c.b16 %v1953, %v1950
        %v1984 = vpack.c.b16 %v1957, %v1954
        %v1985 = vpack.c.b16 %v1958, %v1955
        %v1986 = vpack.c.b16 %v1959, %v1956
        %v1987 = vpack.c.b16 %v1963, %v1960
        %v1988 = vpack.c.b16 %v1964, %v1961
        %v1989 = vpack.c.b16 %v1965, %v1962
        %2014 = vmatpush.bf16.msra.mxu0 %v1987
        %2015 = vmatpush.bf16.msra.mxu0 %v1984
        %2016 = vmatpush.bf16.msra.mxu0 %v1981
        %2017 = vmatpush.bf16.msra.mxu0 %v1978
        %2018 = vmatpush.bf16.msra.mxu0 %v1975
        %2019 = vmatpush.bf16.msra.mxu0 %v1972
        %2020 = vmatpush.bf16.msra.mxu0 %v1969
        %2021 = vmatpush.bf16.msra.mxu0 %v1966
        %2022 = vmatmul.bf16.gmra.mxu0 %v1621
        %v2023 = vpop.f32.mrf.mxu0
        %v2024 = vadd.f32 %v1857, %v2023
        %v2025 = vpop.f32.mrf.mxu0
        %2026 = vdwg.mxu0
        %2027 = vmatpush.bf16.msra.mxu0 %v1988
        %2028 = vmatpush.bf16.msra.mxu0 %v1985
        %2029 = vmatpush.bf16.msra.mxu0 %v1982
        %2030 = vmatpush.bf16.msra.mxu0 %v1979
        %2031 = vmatpush.bf16.msra.mxu0 %v1976
        %2032 = vmatpush.bf16.msra.mxu0 %v1973
        %2033 = vmatpush.bf16.msra.mxu0 %v1970
        %2034 = vmatpush.bf16.msra.mxu0 %v1967
        %2035 = vmatmul.bf16.gmra.mxu0 %v1621
        %v2036 = vpop.f32.mrf.mxu0
        %v2037 = vadd.f32 %v1870, %v2036
        %v2038 = vpop.f32.mrf.mxu0
        %2039 = vdwg.mxu0
        %2040 = vmatpush.bf16.msra.mxu0 %v1989
        %2041 = vmatpush.bf16.msra.mxu0 %v1986
        %2042 = vmatpush.bf16.msra.mxu0 %v1983
        %2043 = vmatpush.bf16.msra.mxu0 %v1980
        %2044 = vmatpush.bf16.msra.mxu0 %v1977
        %2045 = vmatpush.bf16.msra.mxu0 %v1974
        %2046 = vmatpush.bf16.msra.mxu0 %v1971
        %2047 = vmatpush.bf16.msra.mxu0 %v1968
        %2048 = vmatmul.bf16.gmra.mxu0 %v1621
        %v2049 = vpop.f32.mrf.mxu0
        %v2050 = vadd.f32 %v1883, %v2049
        %v2051 = vpop.f32.mrf.mxu0
        %2052 = vdwg.mxu0
        %v2053 = vld [vmem:[%s9] sm:$0x7]
        %v2055 = vperm.slane %v2053, 0
        %v2056 = vperm.slane %v2053, 1
        %v2057 = vperm.slane %v2053, 2
        %v2061 = vadd.f32 %v2024, %v2055
        %v2062 = vadd.f32 %v2037, %v2056
        %v2063 = vadd.f32 %v2050, %v2057
        %v2064 = vpack.c.bf16 %v792, %v792
        %v2065 = vld [vmem:[#allocation16] sm:$0xff]
        %v2066 = vld [vmem:[#allocation16 + $0x8] sm:$0xf]
        %v2067 = vld [vmem:[#allocation16 + $0xc] sm:$0xff]
        %v2068 = vld [vmem:[#allocation16 + $0x14] sm:$0xf]
        %v2069 = vld [vmem:[#allocation16 + $0x18] sm:$0xff]
        %v2070 = vld [vmem:[#allocation16 + $0x20] sm:$0xf]
        %v2071 = vld [vmem:[#allocation16 + $0x24] sm:$0xff]
        %v2072 = vld [vmem:[#allocation16 + $0x2c] sm:$0xf]
        %v2073 = vld [vmem:[#allocation16 + $0x30] sm:$0xff]
        %v2074 = vld [vmem:[#allocation16 + $0x38] sm:$0xf]
        %v2075 = vld [vmem:[#allocation16 + $0x3c] sm:$0xff]
        %v2076 = vld [vmem:[#allocation16 + $0x44] sm:$0xf]
        %v2077 = vld [vmem:[#allocation16 + $0x48] sm:$0xff]
        %v2078 = vld [vmem:[#allocation16 + $0x50] sm:$0xf]
        %v2079 = vld [vmem:[#allocation16 + $0x54] sm:$0xff]
        %v2080 = vld [vmem:[#allocation16 + $0x5c] sm:$0xf]
        %v2081 = vld [vmem:[#allocation16 + $0x60] sm:$0xff]
        %v2082 = vld [vmem:[#allocation16 + $0x68] sm:$0xf]
        %v2083 = vld [vmem:[#allocation16 + $0x6c] sm:$0xff]
        %v2084 = vld [vmem:[#allocation16 + $0x74] sm:$0xf]
        %v2085 = vld [vmem:[#allocation16 + $0x78] sm:$0xff]
        %v2086 = vld [vmem:[#allocation16 + $0x80] sm:$0xf]
        %v2087 = vld [vmem:[#allocation16 + $0x84] sm:$0xff]
        %v2088 = vld [vmem:[#allocation16 + $0x8c] sm:$0xf]
        %v2089 = vld [vmem:[#allocation16 + $0x90] sm:$0xff]
        %v2090 = vld [vmem:[#allocation16 + $0x98] sm:$0xf]
        %v2091 = vld [vmem:[#allocation16 + $0x9c] sm:$0xff]
        %v2092 = vld [vmem:[#allocation16 + $0xa4] sm:$0xf]
        %v2093 = vld [vmem:[#allocation16 + $0xa8] sm:$0xff]
        %v2094 = vld [vmem:[#allocation16 + $0xb0] sm:$0xf]
        %v2095 = vld [vmem:[#allocation16 + $0xb4] sm:$0xff]
        %v2096 = vld [vmem:[#allocation16 + $0xbc] sm:$0xf]
        %v2097 = vld [vmem:[#allocation17] sm:$0x7]
        %v2099 = vperm.slane %v2097, 0
        %v2100 = vperm.slane %v2097, 1
        %v2101 = vperm.slane %v2097, 2
        %v2137 = vunpack.c.l.b16 %v2065
        %v2138 = vunpack.c.h.b16 %v2065
        %v2139 = vunpack.c.l.b16 %v2066
        %v2140 = vunpack.c.l.b16 %v2067
        %v2141 = vunpack.c.h.b16 %v2067
        %v2142 = vunpack.c.l.b16 %v2068
        %v2143 = vunpack.c.l.b16 %v2069
        %v2144 = vunpack.c.h.b16 %v2069
        %v2145 = vunpack.c.l.b16 %v2070
        %v2146 = vunpack.c.l.b16 %v2071
        %v2147 = vunpack.c.h.b16 %v2071
        %v2148 = vunpack.c.l.b16 %v2072
        %v2149 = vunpack.c.l.b16 %v2073
        %v2150 = vunpack.c.h.b16 %v2073
        %v2151 = vunpack.c.l.b16 %v2074
        %v2152 = vunpack.c.l.b16 %v2075
        %v2153 = vunpack.c.h.b16 %v2075
        %v2154 = vunpack.c.l.b16 %v2076
        %v2155 = vunpack.c.l.b16 %v2077
        %v2156 = vunpack.c.h.b16 %v2077
        %v2157 = vunpack.c.l.b16 %v2078
        %v2158 = vunpack.c.l.b16 %v2079
        %v2159 = vunpack.c.h.b16 %v2079
        %v2160 = vunpack.c.l.b16 %v2080
        %v2161 = vunpack.c.l.b16 %v2081
        %v2162 = vunpack.c.h.b16 %v2081
        %v2163 = vunpack.c.l.b16 %v2082
        %v2164 = vunpack.c.l.b16 %v2083
        %v2165 = vunpack.c.h.b16 %v2083
        %v2166 = vunpack.c.l.b16 %v2084
        %v2167 = vunpack.c.l.b16 %v2085
        %v2168 = vunpack.c.h.b16 %v2085
        %v2169 = vunpack.c.l.b16 %v2086
        %v2170 = vunpack.c.l.b16 %v2087
        %v2171 = vunpack.c.h.b16 %v2087
        %v2172 = vunpack.c.l.b16 %v2088
        %v2173 = vunpack.c.l.b16 %v2089
        %v2174 = vunpack.c.h.b16 %v2089
        %v2175 = vunpack.c.l.b16 %v2090
        %v2176 = vunpack.c.l.b16 %v2091
        %v2177 = vunpack.c.h.b16 %v2091
        %v2178 = vunpack.c.l.b16 %v2092
        %v2179 = vunpack.c.l.b16 %v2093
        %v2180 = vunpack.c.h.b16 %v2093
        %v2181 = vunpack.c.l.b16 %v2094
        %v2182 = vunpack.c.l.b16 %v2095
        %v2183 = vunpack.c.h.b16 %v2095
        %v2184 = vunpack.c.l.b16 %v2096
        %v2185 = vpack.c.b16 %v2140, %v2137
        %v2186 = vpack.c.b16 %v2141, %v2138
        %v2187 = vpack.c.b16 %v2142, %v2139
        %v2188 = vpack.c.b16 %v2146, %v2143
        %v2189 = vpack.c.b16 %v2147, %v2144
        %v2190 = vpack.c.b16 %v2148, %v2145
        %v2191 = vpack.c.b16 %v2152, %v2149
        %v2192 = vpack.c.b16 %v2153, %v2150
        %v2193 = vpack.c.b16 %v2154, %v2151
        %v2194 = vpack.c.b16 %v2158, %v2155
        %v2195 = vpack.c.b16 %v2159, %v2156
        %v2196 = vpack.c.b16 %v2160, %v2157
        %v2197 = vpack.c.b16 %v2164, %v2161
        %v2198 = vpack.c.b16 %v2165, %v2162
        %v2199 = vpack.c.b16 %v2166, %v2163
        %v2200 = vpack.c.b16 %v2170, %v2167
        %v2201 = vpack.c.b16 %v2171, %v2168
        %v2202 = vpack.c.b16 %v2172, %v2169
        %v2203 = vpack.c.b16 %v2176, %v2173
        %v2204 = vpack.c.b16 %v2177, %v2174
        %v2205 = vpack.c.b16 %v2178, %v2175
        %v2206 = vpack.c.b16 %v2182, %v2179
        %v2207 = vpack.c.b16 %v2183, %v2180
        %v2208 = vpack.c.b16 %v2184, %v2181
        %2233 = vmatpush.bf16.msra.mxu0 %v2206
        %2234 = vmatpush.bf16.msra.mxu0 %v2203
        %2235 = vmatpush.bf16.msra.mxu0 %v2200
        %2236 = vmatpush.bf16.msra.mxu0 %v2197
        %2237 = vmatpush.bf16.msra.mxu0 %v2194
        %2238 = vmatpush.bf16.msra.mxu0 %v2191
        %2239 = vmatpush.bf16.msra.mxu0 %v2188
        %2240 = vmatpush.bf16.msra.mxu0 %v2185
        %2241 = vmatmul.bf16.gmra.mxu0 %v2064
        %v2242 = vpop.f32.mrf.mxu0
        %v2243 = vadd.f32 %v2099, %v2242
        %v2244 = vpop.f32.mrf.mxu0
        %2245 = vdwg.mxu0
        %2246 = vmatpush.bf16.msra.mxu0 %v2207
        %2247 = vmatpush.bf16.msra.mxu0 %v2204
        %2248 = vmatpush.bf16.msra.mxu0 %v2201
        %2249 = vmatpush.bf16.msra.mxu0 %v2198
        %2250 = vmatpush.bf16.msra.mxu0 %v2195
        %2251 = vmatpush.bf16.msra.mxu0 %v2192
        %2252 = vmatpush.bf16.msra.mxu0 %v2189
        %2253 = vmatpush.bf16.msra.mxu0 %v2186
        %2254 = vmatmul.bf16.gmra.mxu0 %v2064
        %v2255 = vpop.f32.mrf.mxu0
        %v2256 = vadd.f32 %v2100, %v2255
        %v2257 = vpop.f32.mrf.mxu0
        %2258 = vdwg.mxu0
        %2259 = vmatpush.bf16.msra.mxu0 %v2208
        %2260 = vmatpush.bf16.msra.mxu0 %v2205
        %2261 = vmatpush.bf16.msra.mxu0 %v2202
        %2262 = vmatpush.bf16.msra.mxu0 %v2199
        %2263 = vmatpush.bf16.msra.mxu0 %v2196
        %2264 = vmatpush.bf16.msra.mxu0 %v2193
        %2265 = vmatpush.bf16.msra.mxu0 %v2190
        %2266 = vmatpush.bf16.msra.mxu0 %v2187
        %2267 = vmatmul.bf16.gmra.mxu0 %v2064
        %v2268 = vpop.f32.mrf.mxu0
        %v2269 = vadd.f32 %v2101, %v2268
        %v2270 = vpop.f32.mrf.mxu0
        %2271 = vdwg.mxu0
        %v2272 = vadd.f32 %v2061, %v2243
        %v2273 = vxor.u32 %v2272, 2147483648
        %v2274 = vmul.f32 %v2273, 1.442695
        %v2275 = vpow.pop %v2274
        %v2276 = vadd.f32 %v2275, 1.0
        %v2277 = vrcp.pop %v2276
        %v2278 = vmul.f32 %v2276, %v2277
        %v2279 = vsub.f32 1.0, %v2278
        %v2280 = vmul.f32 %v2277, %v2279
        %v2281 = vadd.f32 %v2277, %v2280
        %vm2282 = vweird.f32 %v2276
        %vm2283 = vweird.f32 %v2277
        %vm2284 = vmor %vm2282, %vm2283
        %v2285 = vsel %vm2284, %v2277, %v2281
        %v2286 = vand.u32 2147483647, %v2276
        %vm2287 = vcmp.eq.f32.partialorder %v2286, 8.507059e+37
        %v2288 = vand.u32 %v2276, 2147483648
        %v2289 = vor.u32 1.1754944e-38, %v2288
        %v2290 = vsel %vm2287, %v2289, %v2285
        %v2291 = vmul.f32 1.0, %v2290
        %v2292 = vadd.f32 %v2062, %v2256
        %v2293 = vxor.u32 %v2292, 2147483648
        %v2294 = vmul.f32 %v2293, 1.442695
        %v2295 = vpow.pop %v2294
        %v2296 = vadd.f32 %v2295, 1.0
        %v2297 = vrcp.pop %v2296
        %v2298 = vmul.f32 %v2296, %v2297
        %v2299 = vsub.f32 1.0, %v2298
        %v2300 = vmul.f32 %v2297, %v2299
        %v2301 = vadd.f32 %v2297, %v2300
        %vm2302 = vweird.f32 %v2296
        %vm2303 = vweird.f32 %v2297
        %vm2304 = vmor %vm2302, %vm2303
        %v2305 = vsel %vm2304, %v2297, %v2301
        %v2306 = vand.u32 2147483647, %v2296
        %vm2307 = vcmp.eq.f32.partialorder %v2306, 8.507059e+37
        %v2308 = vand.u32 %v2296, 2147483648
        %v2309 = vor.u32 1.1754944e-38, %v2308
        %v2310 = vsel %vm2307, %v2309, %v2305
        %v2311 = vmul.f32 1.0, %v2310
        %v2312 = vmul.f32 %v2291, %v2269
        %v2313 = vadd.f32 %v2063, %v2312
        %v2314 = vtanh.pop %v2313
        %v2315 = vsub.f32 1.0, %v2311
        %v2316 = vmul.f32 %v2315, %v2314
        %v2317 = vmul.f32 %v2311, %v792
        %v2318 = vadd.f32 %v2316, %v2317
        %v2319 = vpack.c.bf16 %v2318, %v2318
        %v2320 = vld [vmem:[#allocation19] sm:$0xff]
        %v2321 = vld [vmem:[#allocation19 + $0x8] sm:$0xf]
        %v2322 = vld [vmem:[#allocation19 + $0xc] sm:$0xff]
        %v2323 = vld [vmem:[#allocation19 + $0x14] sm:$0xf]
        %v2324 = vld [vmem:[#allocation19 + $0x18] sm:$0xff]
        %v2325 = vld [vmem:[#allocation19 + $0x20] sm:$0xf]
        %v2326 = vld [vmem:[#allocation19 + $0x24] sm:$0xff]
        %v2327 = vld [vmem:[#allocation19 + $0x2c] sm:$0xf]
        %v2328 = vld [vmem:[#allocation19 + $0x30] sm:$0xff]
        %v2329 = vld [vmem:[#allocation19 + $0x38] sm:$0xf]
        %v2330 = vld [vmem:[#allocation19 + $0x3c] sm:$0xff]
        %v2331 = vld [vmem:[#allocation19 + $0x44] sm:$0xf]
        %v2332 = vld [vmem:[#allocation19 + $0x48] sm:$0xff]
        %v2333 = vld [vmem:[#allocation19 + $0x50] sm:$0xf]
        %v2334 = vld [vmem:[#allocation19 + $0x54] sm:$0xff]
        %v2335 = vld [vmem:[#allocation19 + $0x5c] sm:$0xf]
        %v2336 = vld [vmem:[#allocation19 + $0x60] sm:$0xff]
        %v2337 = vld [vmem:[#allocation19 + $0x68] sm:$0xf]
        %v2338 = vld [vmem:[#allocation19 + $0x6c] sm:$0xff]
        %v2339 = vld [vmem:[#allocation19 + $0x74] sm:$0xf]
        %v2340 = vld [vmem:[#allocation19 + $0x78] sm:$0xff]
        %v2341 = vld [vmem:[#allocation19 + $0x80] sm:$0xf]
        %v2342 = vld [vmem:[#allocation19 + $0x84] sm:$0xff]
        %v2343 = vld [vmem:[#allocation19 + $0x8c] sm:$0xf]
        %v2344 = vld [vmem:[#allocation19 + $0x90] sm:$0xff]
        %v2345 = vld [vmem:[#allocation19 + $0x98] sm:$0xf]
        %v2346 = vld [vmem:[#allocation19 + $0x9c] sm:$0xff]
        %v2347 = vld [vmem:[#allocation19 + $0xa4] sm:$0xf]
        %v2348 = vld [vmem:[#allocation19 + $0xa8] sm:$0xff]
        %v2349 = vld [vmem:[#allocation19 + $0xb0] sm:$0xf]
        %v2350 = vld [vmem:[#allocation19 + $0xb4] sm:$0xff]
        %v2351 = vld [vmem:[#allocation19 + $0xbc] sm:$0xf]
        %v2352 = vld [vmem:[%s13] sm:$0x7]
        %v2354 = vperm.slane %v2352, 0
        %v2355 = vperm.slane %v2352, 1
        %v2356 = vperm.slane %v2352, 2
        %v2392 = vunpack.c.l.b16 %v2320
        %v2393 = vunpack.c.h.b16 %v2320
        %v2394 = vunpack.c.l.b16 %v2321
        %v2395 = vunpack.c.l.b16 %v2322
        %v2396 = vunpack.c.h.b16 %v2322
        %v2397 = vunpack.c.l.b16 %v2323
        %v2398 = vunpack.c.l.b16 %v2324
        %v2399 = vunpack.c.h.b16 %v2324
        %v2400 = vunpack.c.l.b16 %v2325
        %v2401 = vunpack.c.l.b16 %v2326
        %v2402 = vunpack.c.h.b16 %v2326
        %v2403 = vunpack.c.l.b16 %v2327
        %v2404 = vunpack.c.l.b16 %v2328
        %v2405 = vunpack.c.h.b16 %v2328
        %v2406 = vunpack.c.l.b16 %v2329
        %v2407 = vunpack.c.l.b16 %v2330
        %v2408 = vunpack.c.h.b16 %v2330
        %v2409 = vunpack.c.l.b16 %v2331
        %v2410 = vunpack.c.l.b16 %v2332
        %v2411 = vunpack.c.h.b16 %v2332
        %v2412 = vunpack.c.l.b16 %v2333
        %v2413 = vunpack.c.l.b16 %v2334
        %v2414 = vunpack.c.h.b16 %v2334
        %v2415 = vunpack.c.l.b16 %v2335
        %v2416 = vunpack.c.l.b16 %v2336
        %v2417 = vunpack.c.h.b16 %v2336
        %v2418 = vunpack.c.l.b16 %v2337
        %v2419 = vunpack.c.l.b16 %v2338
        %v2420 = vunpack.c.h.b16 %v2338
        %v2421 = vunpack.c.l.b16 %v2339
        %v2422 = vunpack.c.l.b16 %v2340
        %v2423 = vunpack.c.h.b16 %v2340
        %v2424 = vunpack.c.l.b16 %v2341
        %v2425 = vunpack.c.l.b16 %v2342
        %v2426 = vunpack.c.h.b16 %v2342
        %v2427 = vunpack.c.l.b16 %v2343
        %v2428 = vunpack.c.l.b16 %v2344
        %v2429 = vunpack.c.h.b16 %v2344
        %v2430 = vunpack.c.l.b16 %v2345
        %v2431 = vunpack.c.l.b16 %v2346
        %v2432 = vunpack.c.h.b16 %v2346
        %v2433 = vunpack.c.l.b16 %v2347
        %v2434 = vunpack.c.l.b16 %v2348
        %v2435 = vunpack.c.h.b16 %v2348
        %v2436 = vunpack.c.l.b16 %v2349
        %v2437 = vunpack.c.l.b16 %v2350
        %v2438 = vunpack.c.h.b16 %v2350
        %v2439 = vunpack.c.l.b16 %v2351
        %v2440 = vpack.c.b16 %v2395, %v2392
        %v2441 = vpack.c.b16 %v2396, %v2393
        %v2442 = vpack.c.b16 %v2397, %v2394
        %v2443 = vpack.c.b16 %v2401, %v2398
        %v2444 = vpack.c.b16 %v2402, %v2399
        %v2445 = vpack.c.b16 %v2403, %v2400
        %v2446 = vpack.c.b16 %v2407, %v2404
        %v2447 = vpack.c.b16 %v2408, %v2405
        %v2448 = vpack.c.b16 %v2409, %v2406
        %v2449 = vpack.c.b16 %v2413, %v2410
        %v2450 = vpack.c.b16 %v2414, %v2411
        %v2451 = vpack.c.b16 %v2415, %v2412
        %v2452 = vpack.c.b16 %v2419, %v2416
        %v2453 = vpack.c.b16 %v2420, %v2417
        %v2454 = vpack.c.b16 %v2421, %v2418
        %v2455 = vpack.c.b16 %v2425, %v2422
        %v2456 = vpack.c.b16 %v2426, %v2423
        %v2457 = vpack.c.b16 %v2427, %v2424
        %v2458 = vpack.c.b16 %v2431, %v2428
        %v2459 = vpack.c.b16 %v2432, %v2429
        %v2460 = vpack.c.b16 %v2433, %v2430
        %v2461 = vpack.c.b16 %v2437, %v2434
        %v2462 = vpack.c.b16 %v2438, %v2435
        %v2463 = vpack.c.b16 %v2439, %v2436
        %2488 = vmatpush.bf16.msra.mxu0 %v2461
        %2489 = vmatpush.bf16.msra.mxu0 %v2458
        %2490 = vmatpush.bf16.msra.mxu0 %v2455
        %2491 = vmatpush.bf16.msra.mxu0 %v2452
        %2492 = vmatpush.bf16.msra.mxu0 %v2449
        %2493 = vmatpush.bf16.msra.mxu0 %v2446
        %2494 = vmatpush.bf16.msra.mxu0 %v2443
        %2495 = vmatpush.bf16.msra.mxu0 %v2440
        %2496 = vmatmul.bf16.gmra.mxu0 %v2319
        %v2497 = vpop.f32.mrf.mxu0
        %v2498 = vadd.f32 %v2354, %v2497
        %v2499 = vpop.f32.mrf.mxu0
        %2500 = vdwg.mxu0
        %2501 = vmatpush.bf16.msra.mxu0 %v2462
        %2502 = vmatpush.bf16.msra.mxu0 %v2459
        %2503 = vmatpush.bf16.msra.mxu0 %v2456
        %2504 = vmatpush.bf16.msra.mxu0 %v2453
        %2505 = vmatpush.bf16.msra.mxu0 %v2450
        %2506 = vmatpush.bf16.msra.mxu0 %v2447
        %2507 = vmatpush.bf16.msra.mxu0 %v2444
        %2508 = vmatpush.bf16.msra.mxu0 %v2441
        %2509 = vmatmul.bf16.gmra.mxu0 %v2319
        %v2510 = vpop.f32.mrf.mxu0
        %v2511 = vadd.f32 %v2355, %v2510
        %v2512 = vpop.f32.mrf.mxu0
        %2513 = vdwg.mxu0
        %2514 = vmatpush.bf16.msra.mxu0 %v2463
        %2515 = vmatpush.bf16.msra.mxu0 %v2460
        %2516 = vmatpush.bf16.msra.mxu0 %v2457
        %2517 = vmatpush.bf16.msra.mxu0 %v2454
        %2518 = vmatpush.bf16.msra.mxu0 %v2451
        %2519 = vmatpush.bf16.msra.mxu0 %v2448
        %2520 = vmatpush.bf16.msra.mxu0 %v2445
        %2521 = vmatpush.bf16.msra.mxu0 %v2442
        %2522 = vmatmul.bf16.gmra.mxu0 %v2319
        %v2523 = vpop.f32.mrf.mxu0
        %v2524 = vadd.f32 %v2356, %v2523
        %v2525 = vpop.f32.mrf.mxu0
        %2526 = vdwg.mxu0
        %v2527 = vadd.f32 %v2498, %v1064
        %v2528 = vxor.u32 %v2527, 2147483648
        %v2529 = vmul.f32 %v2528, 1.442695
        %v2530 = vpow.pop %v2529
        %v2531 = vadd.f32 %v2530, 1.0
        %v2532 = vrcp.pop %v2531
        %v2533 = vmul.f32 %v2531, %v2532
        %v2534 = vsub.f32 1.0, %v2533
        %v2535 = vmul.f32 %v2532, %v2534
        %v2536 = vadd.f32 %v2532, %v2535
        %vm2537 = vweird.f32 %v2531
        %vm2538 = vweird.f32 %v2532
        %vm2539 = vmor %vm2537, %vm2538
        %v2540 = vsel %vm2539, %v2532, %v2536
        %v2541 = vand.u32 2147483647, %v2531
        %vm2542 = vcmp.eq.f32.partialorder %v2541, 8.507059e+37
        %v2543 = vand.u32 %v2531, 2147483648
        %v2544 = vor.u32 1.1754944e-38, %v2543
        %v2545 = vsel %vm2542, %v2544, %v2540
        %v2546 = vmul.f32 1.0, %v2545
        %v2547 = vadd.f32 %v2511, %v1065
        %v2548 = vxor.u32 %v2547, 2147483648
        %v2549 = vmul.f32 %v2548, 1.442695
        %v2550 = vpow.pop %v2549
        %v2551 = vadd.f32 %v2550, 1.0
        %v2552 = vrcp.pop %v2551
        %v2553 = vmul.f32 %v2551, %v2552
        %v2554 = vsub.f32 1.0, %v2553
        %v2555 = vmul.f32 %v2552, %v2554
        %v2556 = vadd.f32 %v2552, %v2555
        %vm2557 = vweird.f32 %v2551
        %vm2558 = vweird.f32 %v2552
        %vm2559 = vmor %vm2557, %vm2558
        %v2560 = vsel %vm2559, %v2552, %v2556
        %v2561 = vand.u32 2147483647, %v2551
        %vm2562 = vcmp.eq.f32.partialorder %v2561, 8.507059e+37
        %v2563 = vand.u32 %v2551, 2147483648
        %v2564 = vor.u32 1.1754944e-38, %v2563
        %v2565 = vsel %vm2562, %v2564, %v2560
        %v2566 = vmul.f32 1.0, %v2565
        %v2567 = vmul.f32 %v2546, %v1066
        %v2568 = vadd.f32 %v2524, %v2567
        %v2569 = vtanh.pop %v2568
        %v2570 = vsub.f32 1.0, %v2566
        %v2571 = vmul.f32 %v2570, %v2569
        %v2572 = vmul.f32 %v2566, %v794
        %v2573 = vadd.f32 %v2571, %v2572
        %2574 = vst [vmem:[#allocation24] sm:$0xff] %v2318
        %2575 = vst [vmem:[%s793] sm:$0xff] %v2573
        %v2576 = vpack.c.bf16 %v2573, %v2573
        %v2577 = vld [vmem:[#allocation22] sm:$0xf]
        %v2578 = vld [vmem:[#allocation22 + $0x4] sm:$0xf]
        %v2579 = vld [vmem:[#allocation22 + $0x8] sm:$0xf]
        %v2580 = vld [vmem:[#allocation22 + $0xc] sm:$0xf]
        %v2581 = vld [vmem:[#allocation22 + $0x10] sm:$0xf]
        %v2582 = vld [vmem:[#allocation22 + $0x14] sm:$0xf]
        %v2583 = vld [vmem:[#allocation22 + $0x18] sm:$0xf]
        %v2584 = vld [vmem:[#allocation22 + $0x1c] sm:$0xf]
        %v2585 = vld [vmem:[#allocation22 + $0x20] sm:$0xf]
        %v2586 = vld [vmem:[#allocation22 + $0x24] sm:$0xf]
        %v2587 = vld [vmem:[#allocation22 + $0x28] sm:$0xf]
        %v2588 = vld [vmem:[#allocation22 + $0x2c] sm:$0xf]
        %v2589 = vld [vmem:[#allocation22 + $0x30] sm:$0xf]
        %v2590 = vld [vmem:[#allocation22 + $0x34] sm:$0xf]
        %v2591 = vld [vmem:[#allocation22 + $0x38] sm:$0xf]
        %v2592 = vld [vmem:[#allocation22 + $0x3c] sm:$0xf]
        %v2593 = vld [vmem:[%s16] sm:$0x1]
        %v2595 = vperm.slane %v2593, 0
        %v2613 = vunpack.c.l.b16 %v2577
        %v2614 = vunpack.c.l.b16 %v2578
        %v2615 = vunpack.c.l.b16 %v2579
        %v2616 = vunpack.c.l.b16 %v2580
        %v2617 = vunpack.c.l.b16 %v2581
        %v2618 = vunpack.c.l.b16 %v2582
        %v2619 = vunpack.c.l.b16 %v2583
        %v2620 = vunpack.c.l.b16 %v2584
        %v2621 = vunpack.c.l.b16 %v2585
        %v2622 = vunpack.c.l.b16 %v2586
        %v2623 = vunpack.c.l.b16 %v2587
        %v2624 = vunpack.c.l.b16 %v2588
        %v2625 = vunpack.c.l.b16 %v2589
        %v2626 = vunpack.c.l.b16 %v2590
        %v2627 = vunpack.c.l.b16 %v2591
        %v2628 = vunpack.c.l.b16 %v2592
        %v2629 = vpack.c.b16 %v2614, %v2613
        %v2630 = vpack.c.b16 %v2616, %v2615
        %v2631 = vpack.c.b16 %v2618, %v2617
        %v2632 = vpack.c.b16 %v2620, %v2619
        %v2633 = vpack.c.b16 %v2622, %v2621
        %v2634 = vpack.c.b16 %v2624, %v2623
        %v2635 = vpack.c.b16 %v2626, %v2625
        %v2636 = vpack.c.b16 %v2628, %v2627
        %2645 = vmatpush.bf16.msra.mxu0 %v2636
        %2646 = vmatpush.bf16.msra.mxu0 %v2635
        %2647 = vmatpush.bf16.msra.mxu0 %v2634
        %2648 = vmatpush.bf16.msra.mxu0 %v2633
        %2649 = vmatpush.bf16.msra.mxu0 %v2632
        %2650 = vmatpush.bf16.msra.mxu0 %v2631
        %2651 = vmatpush.bf16.msra.mxu0 %v2630
        %2652 = vmatpush.bf16.msra.mxu0 %v2629
        %2653 = vmatmul.bf16.gmra.mxu0 %v2576
        %v2654 = vpop.f32.mrf.mxu0
        %v2655 = vadd.f32 %v2595, %v2654
        %v2656 = vpop.f32.mrf.mxu0
        %2657 = vdwg.mxu0
        %2658 = vmax.xlane.f32.xlu0 %v2655
        %v2659 = vpop.xlane.xlu0 %2658
        %v2660 = vsub.f32 %v2655, %v2659
        %v2661 = vmul.f32 %v2660, 1.442695
        %v2662 = vpow.pop %v2661
        %2663 = vadd.xlane.f32.xlu0 %v2662
        %v2664 = vpop.xlane.xlu0 %2663
        %v2665 = vlog2.pop %v2664
        %v2666 = vmul.f32 %v2665, 0.6931472
        %v2667 = vadd.f32 %v2659, %v2666
        %v2668 = vsub.f32 %v2655, %v2667
        %2669 = vst [vmem:[%s781] sm:$0xff] %v2668
        %s2670 = sand.u32 %s413, 1
        %s2671 = scalar_lea.sflag [#allocation4], %s2670
        %s2672 = sand.u32 %s413, 1
        %s2673 = smul.addr %s2672, 8
        %s2674 = scalar_lea.vmem [#allocation23], %s2673
        // Predicated region
        $region145: #{bahdanau_decode.1} parent=87 // pred_check
          %p2675 = pneg %p423
        $region146: #{bahdanau_decode.1} parent=87 // pred_check_branch
          %2677 = sbr.rel (%p2675) target = $region148
        $region147: #{bahdanau_decode.1} parent=87 // pred_region
          %2679 = vsyncadd %s2671, 0
          %s2680 = smul.addr %s43, 8
          %s2681 = scalar_lea.hbm %s17, %s2680
          %s2683 = sshll.u32 %s2674, 4
          %s2684 = int_to_ptr.vmem [resolvable:$true] %s2683
          %s2685 = sshll.u32 %s2681, 4
          %s2686 = int_to_ptr.hbm [resolvable:$true] %s2685
          %2688 = dma.vmem_to_hbm [thread:$0]  %s2684, 128, %s2686, %s2671
        $region148: #{bahdanau_decode.1} parent=87 // pred_fallthru
          _
        // Predicated region
        $region149: #{bahdanau_decode.1} parent=87 // pred_check
          %p2689 = pneg %p444
        $region150: #{bahdanau_decode.1} parent=87 // pred_check_branch
          %2691 = sbr.rel (%p2689) target = $region152
        $region151: #{bahdanau_decode.1} parent=87 // pred_region
          %2693 = vsyncadd [#allocation25], 0
          %s2694 = sshll.u32 [#allocation24], 4
          %s2695 = int_to_ptr.vmem [resolvable:$true] %s2694
          %s2696 = sshll.u32 %s18, 4
          %s2697 = int_to_ptr.hbm [resolvable:$true] %s2696
          %2702 = dma.vmem_to_hbm [thread:$0]  %s2695, 256, %s2697, [#allocation25], 128, 128, 8
        $region152: #{bahdanau_decode.1} parent=87 // pred_fallthru
          _
        // Predicated region
        $region153: #{bahdanau_decode.1} parent=87 // pred_check
          %p2703 = pneg %p444
        $region154: #{bahdanau_decode.1} parent=87 // pred_check_branch
          %2705 = sbr.rel (%p2703) target = $region156
        $region155: #{bahdanau_decode.1} parent=87 // pred_region
          %2707 = dma.done [#allocation25], 256
        $region156: #{bahdanau_decode.1} parent=87 // pred_fallthru
          _
      $region88: #{bahdanau_decode.1} parent=5 // pred_fallthru
        _
      %p2708 = scmp.le.s32.totalorder 2, %s38
      // Predicated region
      $region157: #{bahdanau_decode.1} parent=5 // pred_check
        %p2709 = pneg %p2708
      $region158: #{bahdanau_decode.1} parent=5 // pred_check_branch
        %2711 = sbr.rel (%p2709) target = $region160
      $region159: #{bahdanau_decode.1} parent=5 // pred_region
        %s2712 = ssub.s32 %s38, 2
        // Predicated region
        $region161: #{bahdanau_decode.1} parent=159 // pred_check
          %p2713 = pneg %p429
        $region162: #{bahdanau_decode.1} parent=159 // pred_check_branch
          %2715 = sbr.rel (%p2713) target = $region164
        $region163: #{bahdanau_decode.1} parent=159 // pred_region
          %s2716 = sand.u32 %s414, 1
          %s2717 = scalar_lea.sflag [#allocation4], %s2716
          %s2718 = sand.u32 %s414, 1
          %s2719 = smul.addr %s2718, 8
          %s2720 = scalar_lea.vmem [#allocation23], %s2719
          %2722 = dma.done %s2717, 128
        $region164: #{bahdanau_decode.1} parent=159 // pred_fallthru
          _
      $region160: #{bahdanau_decode.1} parent=5 // pred_fallthru
        _
    $region6: #{bahdanau_decode.1} parent=1 // loop_footer
      %s42 = sadd.s32 1, %s38
    $region7: #{bahdanau_decode.1} parent=1 // loop_footer_branch
      %37 = sbr.rel target = $region3
    $region8: #{bahdanau_decode.1} parent=1 // loop_exit
      _
    %2723 = vsyncpa [#allocation3], 1
    %s2724 = scalar_lea.sflag [#allocation3], 1
    %2725 = vsyncpa %s2724, 1
    %2726 = vsyncpa [#allocation6], 1
    %2727 = vsyncpa [#allocation9], 1
    %2728 = vsyncpa [#allocation12], 1
    %2729 = vsyncpa [#allocation15], 1
    %2730 = vsyncpa [#allocation18], 1
    %2731 = vsyncpa [#allocation21], 1
    %2732 = vsyncpa [#allocation4], 1
    %s2733 = scalar_lea.sflag [#allocation4], 1
    %2734 = vsyncpa %s2733, 1
    %2735 = vsyncpa [#allocation25], 1

</llo_original>
